<compile_context>
chip_gen: v5e
topology: v5e:2x2
jax: 0.10.0
libtpu: 0.0.40
codegen_flags: <defaults>
</compile_context>

<pallas_src>
import functools
import math

import jax
import jax.numpy as jnp
from jax.experimental import pallas as pl
from jax.experimental.pallas import tpu as pltpu


# ----------------------------------------------------------------------------
# shared in-kernel helpers
# ----------------------------------------------------------------------------
def _gather_matrix(flat, dy, dx, H, W, band_lo, band_len):
    """Weighted one-hot gather matrix G of shape (band_len, TP).

    G[s, q] = bilinear weight of source flat pixel (band_lo + s) for destination
    pixel with flat index flat[0, q] displaced by (dy, dx), with
    grid_sample(align_corners=True, padding_mode='zeros') semantics.
    """
    tp = flat.shape[-1]
    # destination (row, col) from the flat index (in-kernel reference grid)
    if (W & (W - 1)) == 0:                      # power-of-two: shifts/masks
        yb = flat >> (W.bit_length() - 1)
        xb = flat & (W - 1)
    else:
        yb = flat // W
        xb = flat - yb * W
    cy = yb.astype(jnp.float32) + dy            # (1, TP) sample row (unclamped)
    cx = xb.astype(jnp.float32) + dx            # (1, TP) sample col (unclamped)

    y0f = jnp.floor(cy)
    x0f = jnp.floor(cx)
    fy = cy - y0f
    fx = cx - x0f
    y0 = y0f.astype(jnp.int32)
    x0 = x0f.astype(jnp.int32)

    # "zeros" padding: out-of-bounds corner taps contribute nothing; the masked
    # weight also neutralizes flat-index aliasing of OOB corners.
    iy0 = (y0 >= 0) & (y0 < H)
    iy1 = (y0 >= -1) & (y0 < H - 1)
    ix0 = (x0 >= 0) & (x0 < W)
    ix1 = (x0 >= -1) & (x0 < W - 1)
    w00 = jnp.where(iy0 & ix0, (1.0 - fy) * (1.0 - fx), 0.0)
    w01 = jnp.where(iy0 & ix1, (1.0 - fy) * fx, 0.0)
    w10 = jnp.where(iy1 & ix0, fy * (1.0 - fx), 0.0)
    w11 = jnp.where(iy1 & ix1, fy * fx, 0.0)

    # relative-index one-hot: one subtract + vector-immediate compares
    f00 = y0 * W + x0 - band_lo                 # (1, TP)
    r = jax.lax.broadcasted_iota(jnp.int32, (band_len, tp), 0) - f00
    return jnp.where(r == 0, w00,
           jnp.where(r == W, w10,
           jnp.where(r == 1, w01,
           jnp.where(r == W + 1, w11, 0.0))))


# ----------------------------------------------------------------------------
# fused DVF2DDF kernel (all squaring steps inside one pallas_call)
# ----------------------------------------------------------------------------
def _dvf2ddf_kernel(dvf_ref, out_ref, fa_ref, fb_ref, *, H, W, TP, scale, bands):
    # dvf_ref : (1, 2, HWp)  velocity field, VMEM-resident per batch
    # out_ref : (1, 2, HWp)  final ddf, written back to HBM once per batch
    # fa/fb   : (2, HWp)     f32 ping-pong field scratch
    # bands   : static tuple of (dest_offset, band_lo_flat, band_len_flat)
    s = pl.program_id(1)

    @pl.when(s == 0)
    def _():                                    # ddf_0 = dvf / 2**num_steps
        fa_ref[...] = dvf_ref[0].astype(jnp.float32) * scale

    def step(src_ref, dst_ref):                 # ddf <- ddf + warp(ddf, ddf)
        src = src_ref[...]                      # (2, HWp) f32, full old field
        for off, lo, blen in bands:             # static destination tiles
            d = src[:, off:off + TP]            # displacement of this dest tile
            flat = off + jax.lax.broadcasted_iota(jnp.int32, (1, TP), 1)
            gmat = _gather_matrix(flat, d[0:1, :], d[1:2, :], H, W, lo, blen)
            warped = jnp.dot(src[:, lo:lo + blen], gmat,
                             preferred_element_type=jnp.float32)   # (2, TP)
            new = d + warped
            dst_ref[:, off:off + TP] = new
            # out block is revisited across steps; only the last step's content
            # is DMA'd to HBM (writeback happens when the batch index changes).
            out_ref[0, :, off:off + TP] = new.astype(out_ref.dtype)

    @pl.when(s % 2 == 0)
    def _():
        step(fa_ref, fb_ref)

    @pl.when(s % 2 == 1)
    def _():
        step(fb_ref, fa_ref)


# ----------------------------------------------------------------------------
# standalone Warp kernel (bilinear / zeros / align_corners=True)
# ----------------------------------------------------------------------------
def _warp_kernel(img_ref, ddf_ref, out_ref, *, H, W, TP):
    # img_ref : (1, C, HWp) full source image, VMEM-resident across p tiles
    # ddf_ref : (1, 2, TP)  displacement tile for this block of destination pixels
    # out_ref : (1, C, TP)
    HWp = img_ref.shape[2]
    p = pl.program_id(1)
    src = img_ref[0].astype(jnp.float32)        # (C, HWp)
    d = ddf_ref[0].astype(jnp.float32)          # (2, TP)
    flat = p * TP + jax.lax.broadcasted_iota(jnp.int32, (1, TP), 1)
    gmat = _gather_matrix(flat, d[0:1, :], d[1:2, :], H, W, 0, HWp)
    out_ref[0] = jnp.dot(src, gmat,
                         preferred_element_type=jnp.float32).astype(out_ref.dtype)


# ----------------------------------------------------------------------------
# host-side helpers: VMEM budget, band planning, tile selection
# ----------------------------------------------------------------------------
def _vmem_budget_bytes():
    cap = 64 * 1024 * 1024
    try:
        info = pltpu.get_tpu_info()
        cap = int(getattr(info, "vmem_capacity_bytes", cap) or cap)
    except Exception:
        pass
    return int(cap * 0.8)      # Mosaic headroom: ~51 MiB on v7x, ~102 MiB on v5e/v6e


def _make_bands(HW, HWp, tile_p, H, W, margin_rows):
    """Static (dest_offset, band_lo_flat, band_len_flat) per non-pad destination tile."""
    bands = []
    for off in range(0, HWp, tile_p):
        if off >= HW:
            continue                            # tile entirely in the zero-pad tail
        if margin_rows is None:
            bands.append((off, 0, HWp))
            continue
        row_lo = off // W
        row_hi = min(H - 1, (off + tile_p - 1) // W)
        lo = max(0, row_lo - margin_rows) * W
        hi = min(H, row_hi + 1 + margin_rows) * W
        lo = (lo // 128) * 128                  # 128-aligned static slices of the field
        hi = min(HWp, ((hi + 127) // 128) * 128)
        bands.append((off, lo, hi - lo))
    return tuple(bands)


def _pick_tile_p(HW, HWp, H, W, C, margin_rows, budget):
    """Largest lane-dense tile whose gather working set fits comfortably in VMEM."""
    for t in (512, 256, 128):
        if t > HWp or HWp % t != 0:
            continue
        band_max = max(b[2] for b in _make_bands(HW, HWp, t, H, W, margin_rows))
        est = 6 * C * HWp * 4 + 4 * band_max * t * 4
        if est <= budget // 2:
            return t
    return 128


# ----------------------------------------------------------------------------
# public wrappers
# ----------------------------------------------------------------------------
@functools.partial(jax.jit, static_argnames=("num_steps", "tile_p", "max_disp_rows"))
def dvf2ddf(dvf, num_steps=7, tile_p=None, max_disp_rows=None):
    """MONAI DVF2DDF forward (2-D): scaling-and-squaring integration of a velocity field.

    max_disp_rows: optional STATIC upper bound on the absolute row displacement (in
      pixels) at any intermediate step; for DVF2DDF, max|dvf[:, 0]| is always a valid
      bound.  When given, the gather is band-limited to the reachable source-row band
      of each destination tile.
    """
    if num_steps <= 0:
        raise ValueError(f"expecting positive num_steps, got {num_steps}")
    B, C, H, W = dvf.shape
    assert C == 2, "2-D DVF expected: (B, 2, H, W)"
    assert W >= 2
    HW = H * W
    HWp = ((HW + 127) // 128) * 128             # lane-dense padding
    margin = None if max_disp_rows is None else int(math.ceil(float(max_disp_rows))) + 1
    budget = _vmem_budget_bytes()
    tp = tile_p if tile_p is not None else _pick_tile_p(HW, HWp, H, W, C, margin, budget)
    assert HWp % tp == 0, f"tile_p={tp} must divide padded HW={HWp}"
    bands = _make_bands(HW, HWp, tp, H, W, margin)

    dvf_flat = dvf.reshape(B, C, HW)
    if HWp != HW:
        dvf_flat = jnp.pad(dvf_flat, ((0, 0), (0, 0), (0, HWp - HW)))

    kernel = functools.partial(_dvf2ddf_kernel, H=H, W=W, TP=tp,
                               scale=1.0 / (2.0 ** num_steps), bands=bands)
    out = pl.pallas_call(
        kernel,
        out_shape=jax.ShapeDtypeStruct((B, C, HWp), dvf.dtype),
        grid=(B, num_steps),
        in_specs=[pl.BlockSpec((1, C, HWp), lambda b, s: (b, 0, 0))],
        out_specs=pl.BlockSpec((1, C, HWp), lambda b, s: (b, 0, 0)),
        scratch_shapes=[pltpu.VMEM((C, HWp), jnp.float32),    # field ping
                        pltpu.VMEM((C, HWp), jnp.float32)],   # field pong
        compiler_params=pltpu.CompilerParams(
            dimension_semantics=("parallel", "arbitrary"),
            vmem_limit_bytes=budget),
    )(dvf_flat)
    return out[:, :, :HW].reshape(B, C, H, W)


@functools.partial(jax.jit, static_argnames=("tile_p",))
def warp(image, ddf, tile_p=None):
    """MONAI Warp forward (2-D): bilinear, padding_mode='zeros', align_corners=True."""
    B, C, H, W = image.shape
    assert ddf.shape == (B, 2, H, W), "ddf must be (B, 2, H, W)"
    assert W >= 2
    HW = H * W
    HWp = ((HW + 127) // 128) * 128
    budget = _vmem_budget_bytes()
    tp = tile_p if tile_p is not None else _pick_tile_p(HW, HWp, H, W, C, None, budget)
    assert HWp % tp == 0

    def flat_pad(x):
        xf = x.reshape(B, x.shape[1], HW)
        if HWp != HW:
            xf = jnp.pad(xf, ((0, 0), (0, 0), (0, HWp - HW)))
        return xf

    kernel = functools.partial(_warp_kernel, H=H, W=W, TP=tp)
    out = pl.pallas_call(
        kernel,
        out_shape=jax.ShapeDtypeStruct((B, C, HWp), image.dtype),
        grid=(B, HWp // tp),
        in_specs=[
            pl.BlockSpec((1, C, HWp), lambda b, p: (b, 0, 0)),   # resident source image
            pl.BlockSpec((1, 2, tp), lambda b, p: (b, 0, p)),    # ddf tile
        ],
        out_specs=pl.BlockSpec((1, C, tp), lambda b, p: (b, 0, p)),
        compiler_params=pltpu.CompilerParams(
            dimension_semantics=("parallel", "parallel"),
            vmem_limit_bytes=budget),
    )(flat_pad(image), flat_pad(ddf))
    return out[:, :, :HW].reshape(B, C, H, W)


# ----------------------------------------------------------------------------
# pure-JAX reference
# ----------------------------------------------------------------------------
def _warp_ref(image, ddf):
    """grid_sample reference: bilinear, padding_mode='zeros', align_corners=True."""
    def one(img, d):
        C, H, W = img.shape
        ys = jnp.arange(H, dtype=jnp.float32)[:, None]
        xs = jnp.arange(W, dtype=jnp.float32)[None, :]
        cy = ys + d[0]
        cx = xs + d[1]
        y0f = jnp.floor(cy)
        x0f = jnp.floor(cx)
        fy = cy - y0f
        fx = cx - x0f
        y0 = y0f.astype(jnp.int32)
        x0 = x0f.astype(jnp.int32)
        y1 = y0 + 1
        x1 = x0 + 1

        def tap(yi, xi, w):
            valid = (yi >= 0) & (yi < H) & (xi >= 0) & (xi < W)
            v = img[:, jnp.clip(yi, 0, H - 1), jnp.clip(xi, 0, W - 1)]
            return jnp.where(valid, w, 0.0)[None, :, :] * v

        return (tap(y0, x0, (1.0 - fy) * (1.0 - fx)) + tap(y0, x1, (1.0 - fy) * fx)
                + tap(y1, x0, fy * (1.0 - fx)) + tap(y1, x1, fy * fx))

    return jax.vmap(one)(image, ddf)


def _dvf2ddf_ref(dvf, num_steps=7):
    ddf = dvf / (2.0 ** num_steps)
    for _ in range(num_steps):
        ddf = ddf + _warp_ref(ddf, ddf)
    return ddf


if __name__ == "__main__":
    num_steps = 7
    key = jax.random.PRNGKey(0)
    k1, k2, k3, k4 = jax.random.split(key, 4)

    # --- DVF2DDF, full-source gather path (B, 2, 16, 16), two tiles per step ---
    B, C, H, W = 2, 2, 16, 16
    dvf = 3.0 * jax.random.normal(k1, (B, C, H, W), dtype=jnp.float32)
    out = jax.block_until_ready(dvf2ddf(dvf, num_steps=num_steps, tile_p=128))
    ref = jax.block_until_ready(_dvf2ddf_ref(dvf, num_steps=num_steps))
    assert out.shape == dvf.shape and out.dtype == dvf.dtype
    err = float(jnp.max(jnp.abs(out - ref)))
    assert jnp.allclose(out, ref, atol=5e-5, rtol=5e-5), f"dvf2ddf mismatch: {err}"

    # --- DVF2DDF, band-limited gather path (1, 2, 32, 16) ---
    dvf2 = 0.5 * jax.random.normal(k2, (1, 2, 32, 16), dtype=jnp.float32)
    bound = float(jnp.max(jnp.abs(dvf2[:, 0])))   # provably safe per-step row bound
    out2 = jax.block_until_ready(
        dvf2ddf(dvf2, num_steps=num_steps, tile_p=128, max_disp_rows=bound))
    ref2 = jax.block_until_ready(_dvf2ddf_ref(dvf2, num_steps=num_steps))
    err2 = float(jnp.max(jnp.abs(out2 - ref2)))
    assert jnp.allclose(out2, ref2, atol=5e-5, rtol=5e-5), f"banded dvf2ddf mismatch: {err2}"

    # --- standalone Warp layer (bilinear / zeros / align_corners=True) ---
    img = jax.random.normal(k3, (2, 3, 16, 16), dtype=jnp.float32)
    ddfw = 2.0 * jax.random.normal(k4, (2, 2, 16, 16), dtype=jnp.float32)
    w_out = jax.block_until_ready(warp(img, ddfw, tile_p=128))
    w_ref = jax.block_until_ready(_warp_ref(img, ddfw))
    werr = float(jnp.max(jnp.abs(w_out - w_ref)))
    assert jnp.allclose(w_out, w_ref, atol=5e-5, rtol=5e-5), f"warp mismatch: {werr}"

    print("KERNEL_OK")
</pallas_src>

<mosaic_0001>
module attributes {stable_mosaic.version = 11 : i64} {
  func.func @_dvf2ddf_kernel(%arg0: i32, %arg1: i32, %arg2: memref<1x2x256xf32, #tpu.memory_space<vmem>>, %arg3: memref<1x2x256xf32, #tpu.memory_space<vmem>>, %arg4: memref<2x256xf32, #tpu.memory_space<vmem>>, %arg5: memref<2x256xf32, #tpu.memory_space<vmem>>) attributes {dimension_semantics = [#tpu.dimension_semantics<parallel>, #tpu.dimension_semantics<arbitrary>], iteration_bounds = array<i64: 2, 7>, scalar_prefetch = 0 : i64, scratch_operands = 2 : i64, tpu.core_type = #tpu.core_type<tc>, window_params = [{transform_indices = @transform_0, window_bounds = array<i64: 1, 2, 256>}, {transform_indices = @transform_1, window_bounds = array<i64: 1, 2, 256>}]} {
    %c0_i32 = arith.constant 0 : i32
    %0 = arith.cmpi eq, %arg1, %c0_i32 : i32
    %1 = arith.extui %0 : i1 to i32
    %c0_i32_0 = arith.constant 0 : i32
    %2 = arith.cmpi ne, %1, %c0_i32_0 : i32
    scf.if %2 {
      %c0 = arith.constant 0 : index
      %c0_15 = arith.constant 0 : index
      %c0_16 = arith.constant 0 : index
      %29 = vector.load %arg2[%c0, %c0_15, %c0_16] : memref<1x2x256xf32, #tpu.memory_space<vmem>>, vector<1x2x256xf32>
      %30 = vector.shape_cast %29 : vector<1x2x256xf32> to vector<2x256xf32>
      %cst = arith.constant 7.812500e-03 : f32
      %31 = vector.broadcast %cst : f32 to vector<2x256xf32>
      %32 = arith.mulf %30, %31 : vector<2x256xf32>
      %c0_17 = arith.constant 0 : index
      %c0_18 = arith.constant 0 : index
      %33 = vector.load %arg4[%c0_17, %c0_18] : memref<2x256xf32, #tpu.memory_space<vmem>>, vector<2x256xf32>
      tpu.vector_store %arg4[%c0_17, %c0_18], %32 {strides = array<i32>} : memref<2x256xf32, #tpu.memory_space<vmem>>, vector<2x256xf32>,
    } else {
    }
    %c2_i32 = arith.constant 2 : i32
    %c0_i32_1 = arith.constant 0 : i32
    %3 = arith.cmpi eq, %c2_i32, %c0_i32_1 : i32
    %c1_i32 = arith.constant 1 : i32
    %4 = arith.select %3, %c1_i32, %c2_i32 : i32
    %5 = arith.remsi %arg1, %4 : i32
    %c0_i32_2 = arith.constant 0 : i32
    %6 = arith.cmpi ne, %5, %c0_i32_2 : i32
    %c0_i32_3 = arith.constant 0 : i32
    %7 = arith.cmpi slt, %5, %c0_i32_3 : i32
    %c0_i32_4 = arith.constant 0 : i32
    %8 = arith.cmpi slt, %4, %c0_i32_4 : i32
    %9 = arith.xori %7, %8 : i1
    %10 = arith.andi %9, %6 : i1
    %11 = arith.addi %5, %4 : i32
    %12 = arith.select %10, %11, %5 : i32
    %c0_i32_5 = arith.constant 0 : i32
    %13 = arith.cmpi eq, %12, %c0_i32_5 : i32
    %14 = arith.extui %13 : i1 to i32
    %c0_i32_6 = arith.constant 0 : i32
    %15 = arith.cmpi ne, %14, %c0_i32_6 : i32
    scf.if %15 {
      %c0 = arith.constant 0 : index
      %c0_15 = arith.constant 0 : index
      %29 = vector.load %arg4[%c0, %c0_15] : memref<2x256xf32, #tpu.memory_space<vmem>>, vector<2x256xf32>
      %30 = vector.extract_strided_slice %29 {offsets = [0, 0], sizes = [2, 128], strides = [1, 1]} : vector<2x256xf32> to vector<2x128xf32>
      %31 = tpu.iota {dimensions = array<i32: 1>} : vector<1x128xi32>
      %c0_i32_16 = arith.constant 0 : i32
      %32 = vector.broadcast %c0_i32_16 : i32 to vector<1x128xi32>
      %33 = arith.addi %32, %31 : vector<1x128xi32>
      %34 = vector.extract_strided_slice %30 {offsets = [0, 0], sizes = [1, 128], strides = [1, 1]} : vector<2x128xf32> to vector<1x128xf32>
      %35 = vector.extract_strided_slice %30 {offsets = [1, 0], sizes = [1, 128], strides = [1, 1]} : vector<2x128xf32> to vector<1x128xf32>
      %c4_i32 = arith.constant 4 : i32
      %36 = vector.broadcast %c4_i32 : i32 to vector<1x128xi32>
      %37 = arith.shrsi %33, %36 : vector<1x128xi32>
      %c15_i32 = arith.constant 15 : i32
      %38 = vector.broadcast %c15_i32 : i32 to vector<1x128xi32>
      %39 = arith.andi %33, %38 : vector<1x128xi32>
      %40 = arith.sitofp %37 : vector<1x128xi32> to vector<1x128xf32>
      %41 = arith.addf %40, %34 : vector<1x128xf32>
      %42 = arith.sitofp %39 : vector<1x128xi32> to vector<1x128xf32>
      %43 = arith.addf %42, %35 : vector<1x128xf32>
      %44 = math.floor %41 : vector<1x128xf32>
      %45 = math.floor %43 : vector<1x128xf32>
      %46 = arith.subf %41, %44 : vector<1x128xf32>
      %47 = arith.subf %43, %45 : vector<1x128xf32>
      %48 = arith.fptosi %44 : vector<1x128xf32> to vector<1x128xi32>
      %49 = arith.fptosi %45 : vector<1x128xf32> to vector<1x128xi32>
      %c0_i32_17 = arith.constant 0 : i32
      %50 = vector.broadcast %c0_i32_17 : i32 to vector<1x128xi32>
      %51 = arith.cmpi sge, %48, %50 : vector<1x128xi32>
      %c16_i32 = arith.constant 16 : i32
      %52 = vector.broadcast %c16_i32 : i32 to vector<1x128xi32>
      %53 = arith.cmpi slt, %48, %52 : vector<1x128xi32>
      %54 = arith.andi %51, %53 : vector<1x128xi1>
      %c-1_i32 = arith.constant -1 : i32
      %55 = vector.broadcast %c-1_i32 : i32 to vector<1x128xi32>
      %56 = arith.cmpi sge, %48, %55 : vector<1x128xi32>
      %c15_i32_18 = arith.constant 15 : i32
      %57 = vector.broadcast %c15_i32_18 : i32 to vector<1x128xi32>
      %58 = arith.cmpi slt, %48, %57 : vector<1x128xi32>
      %59 = arith.andi %56, %58 : vector<1x128xi1>
      %c0_i32_19 = arith.constant 0 : i32
      %60 = vector.broadcast %c0_i32_19 : i32 to vector<1x128xi32>
      %61 = arith.cmpi sge, %49, %60 : vector<1x128xi32>
      %c16_i32_20 = arith.constant 16 : i32
      %62 = vector.broadcast %c16_i32_20 : i32 to vector<1x128xi32>
      %63 = arith.cmpi slt, %49, %62 : vector<1x128xi32>
      %64 = arith.andi %61, %63 : vector<1x128xi1>
      %c-1_i32_21 = arith.constant -1 : i32
      %65 = vector.broadcast %c-1_i32_21 : i32 to vector<1x128xi32>
      %66 = arith.cmpi sge, %49, %65 : vector<1x128xi32>
      %c15_i32_22 = arith.constant 15 : i32
      %67 = vector.broadcast %c15_i32_22 : i32 to vector<1x128xi32>
      %68 = arith.cmpi slt, %49, %67 : vector<1x128xi32>
      %69 = arith.andi %66, %68 : vector<1x128xi1>
      %70 = arith.andi %54, %64 : vector<1x128xi1>
      %cst = arith.constant 1.000000e+00 : f32
      %71 = vector.broadcast %cst : f32 to vector<1x128xf32>
      %72 = arith.subf %71, %46 : vector<1x128xf32>
      %cst_23 = arith.constant 1.000000e+00 : f32
      %73 = vector.broadcast %cst_23 : f32 to vector<1x128xf32>
      %74 = arith.subf %73, %47 : vector<1x128xf32>
      %75 = arith.mulf %72, %74 : vector<1x128xf32>
      %cst_24 = arith.constant 0.000000e+00 : f32
      %76 = vector.broadcast %cst_24 : f32 to vector<1x128xf32>
      %77 = arith.select %70, %75, %76 : vector<1x128xi1>, vector<1x128xf32>
      %78 = arith.andi %54, %69 : vector<1x128xi1>
      %cst_25 = arith.constant 1.000000e+00 : f32
      %79 = vector.broadcast %cst_25 : f32 to vector<1x128xf32>
      %80 = arith.subf %79, %46 : vector<1x128xf32>
      %81 = arith.mulf %80, %47 : vector<1x128xf32>
      %cst_26 = arith.constant 0.000000e+00 : f32
      %82 = vector.broadcast %cst_26 : f32 to vector<1x128xf32>
      %83 = arith.select %78, %81, %82 : vector<1x128xi1>, vector<1x128xf32>
      %84 = arith.andi %59, %64 : vector<1x128xi1>
      %cst_27 = arith.constant 1.000000e+00 : f32
      %85 = vector.broadcast %cst_27 : f32 to vector<1x128xf32>
      %86 = arith.subf %85, %47 : vector<1x128xf32>
      %87 = arith.mulf %46, %86 : vector<1x128xf32>
      %cst_28 = arith.constant 0.000000e+00 : f32
      %88 = vector.broadcast %cst_28 : f32 to vector<1x128xf32>
      %89 = arith.select %84, %87, %88 : vector<1x128xi1>, vector<1x128xf32>
      %90 = arith.andi %59, %69 : vector<1x128xi1>
      %91 = arith.mulf %46, %47 : vector<1x128xf32>
      %cst_29 = arith.constant 0.000000e+00 : f32
      %92 = vector.broadcast %cst_29 : f32 to vector<1x128xf32>
      %93 = arith.select %90, %91, %92 : vector<1x128xi1>, vector<1x128xf32>
      %c16_i32_30 = arith.constant 16 : i32
      %94 = vector.broadcast %c16_i32_30 : i32 to vector<1x128xi32>
      %95 = arith.muli %48, %94 : vector<1x128xi32>
      %96 = arith.addi %95, %49 : vector<1x128xi32>
      %c0_i32_31 = arith.constant 0 : i32
      %97 = vector.broadcast %c0_i32_31 : i32 to vector<1x128xi32>
      %98 = arith.subi %96, %97 : vector<1x128xi32>
      %99 = tpu.iota {dimensions = array<i32: 0>} : vector<256x128xi32>
      %100 = vector.broadcast %98 : vector<1x128xi32> to vector<256x128xi32>
      %101 = arith.subi %99, %100 : vector<256x128xi32>
      %c0_i32_32 = arith.constant 0 : i32
      %102 = vector.broadcast %c0_i32_32 : i32 to vector<256x128xi32>
      %103 = arith.cmpi eq, %101, %102 : vector<256x128xi32>
      %c16_i32_33 = arith.constant 16 : i32
      %104 = vector.broadcast %c16_i32_33 : i32 to vector<256x128xi32>
      %105 = arith.cmpi eq, %101, %104 : vector<256x128xi32>
      %c1_i32_34 = arith.constant 1 : i32
      %106 = vector.broadcast %c1_i32_34 : i32 to vector<256x128xi32>
      %107 = arith.cmpi eq, %101, %106 : vector<256x128xi32>
      %c17_i32 = arith.constant 17 : i32
      %108 = vector.broadcast %c17_i32 : i32 to vector<256x128xi32>
      %109 = arith.cmpi eq, %101, %108 : vector<256x128xi32>
      %cst_35 = arith.constant 0.000000e+00 : f32
      %110 = vector.shape_cast %93 : vector<1x128xf32> to vector<1x128xf32>
      %111 = vector.broadcast %110 : vector<1x128xf32> to vector<256x128xf32>
      %112 = vector.broadcast %cst_35 : f32 to vector<256x128xf32>
      %113 = arith.select %109, %111, %112 : vector<256x128xi1>, vector<256x128xf32>
      %114 = vector.shape_cast %83 : vector<1x128xf32> to vector<1x128xf32>
      %115 = vector.broadcast %114 : vector<1x128xf32> to vector<256x128xf32>
      %116 = arith.select %107, %115, %113 : vector<256x128xi1>, vector<256x128xf32>
      %117 = vector.shape_cast %89 : vector<1x128xf32> to vector<1x128xf32>
      %118 = vector.broadcast %117 : vector<1x128xf32> to vector<256x128xf32>
      %119 = arith.select %105, %118, %116 : vector<256x128xi1>, vector<256x128xf32>
      %120 = vector.shape_cast %77 : vector<1x128xf32> to vector<1x128xf32>
      %121 = vector.broadcast %120 : vector<1x128xf32> to vector<256x128xf32>
      %122 = arith.select %103, %121, %119 : vector<256x128xi1>, vector<256x128xf32>
      %cst_36 = arith.constant dense<0.000000e+00> : vector<2x128xf32>
      %123 = tpu.matmul %29, %122, %cst_36 {dimension_numbers = #tpu.dot_dimension_numbers<[1], [0], [0], [1], [0, 0, 1, 1], [], []>} : vector<2x256xf32>, vector<256x128xf32>, vector<2x128xf32> -> vector<2x128xf32>
      %124 = arith.addf %30, %123 : vector<2x128xf32>
      %c0_37 = arith.constant 0 : index
      %c0_38 = arith.constant 0 : index
      %125 = vector.load %arg5[%c0_37, %c0_38] : memref<2x256xf32, #tpu.memory_space<vmem>>, vector<2x128xf32>
      tpu.vector_store %arg5[%c0_37, %c0_38], %124 {strides = array<i32>} : memref<2x256xf32, #tpu.memory_space<vmem>>, vector<2x128xf32>,
      %c0_39 = arith.constant 0 : index
      %c0_40 = arith.constant 0 : index
      %c0_41 = arith.constant 0 : index
      %126 = vector.load %arg3[%c0_39, %c0_40, %c0_41] : memref<1x2x256xf32, #tpu.memory_space<vmem>>, vector<1x2x128xf32>
      %127 = vector.shape_cast %126 : vector<1x2x128xf32> to vector<2x128xf32>
      %128 = vector.shape_cast %124 : vector<2x128xf32> to vector<1x2x128xf32>
      tpu.vector_store %arg3[%c0_39, %c0_40, %c0_41], %128 {strides = array<i32>} : memref<1x2x256xf32, #tpu.memory_space<vmem>>, vector<1x2x128xf32>,
      %129 = vector.extract_strided_slice %29 {offsets = [0, 128], sizes = [2, 128], strides = [1, 1]} : vector<2x256xf32> to vector<2x128xf32>
      %130 = tpu.iota {dimensions = array<i32: 1>} : vector<1x128xi32>
      %c128_i32 = arith.constant 128 : i32
      %131 = vector.broadcast %c128_i32 : i32 to vector<1x128xi32>
      %132 = arith.addi %131, %130 : vector<1x128xi32>
      %133 = vector.extract_strided_slice %129 {offsets = [0, 0], sizes = [1, 128], strides = [1, 1]} : vector<2x128xf32> to vector<1x128xf32>
      %134 = vector.extract_strided_slice %129 {offsets = [1, 0], sizes = [1, 128], strides = [1, 1]} : vector<2x128xf32> to vector<1x128xf32>
      %c4_i32_42 = arith.constant 4 : i32
      %135 = vector.broadcast %c4_i32_42 : i32 to vector<1x128xi32>
      %136 = arith.shrsi %132, %135 : vector<1x128xi32>
      %c15_i32_43 = arith.constant 15 : i32
      %137 = vector.broadcast %c15_i32_43 : i32 to vector<1x128xi32>
      %138 = arith.andi %132, %137 : vector<1x128xi32>
      %139 = arith.sitofp %136 : vector<1x128xi32> to vector<1x128xf32>
      %140 = arith.addf %139, %133 : vector<1x128xf32>
      %141 = arith.sitofp %138 : vector<1x128xi32> to vector<1x128xf32>
      %142 = arith.addf %141, %134 : vector<1x128xf32>
      %143 = math.floor %140 : vector<1x128xf32>
      %144 = math.floor %142 : vector<1x128xf32>
      %145 = arith.subf %140, %143 : vector<1x128xf32>
      %146 = arith.subf %142, %144 : vector<1x128xf32>
      %147 = arith.fptosi %143 : vector<1x128xf32> to vector<1x128xi32>
      %148 = arith.fptosi %144 : vector<1x128xf32> to vector<1x128xi32>
      %c0_i32_44 = arith.constant 0 : i32
      %149 = vector.broadcast %c0_i32_44 : i32 to vector<1x128xi32>
      %150 = arith.cmpi sge, %147, %149 : vector<1x128xi32>
      %c16_i32_45 = arith.constant 16 : i32
      %151 = vector.broadcast %c16_i32_45 : i32 to vector<1x128xi32>
      %152 = arith.cmpi slt, %147, %151 : vector<1x128xi32>
      %153 = arith.andi %150, %152 : vector<1x128xi1>
      %c-1_i32_46 = arith.constant -1 : i32
      %154 = vector.broadcast %c-1_i32_46 : i32 to vector<1x128xi32>
      %155 = arith.cmpi sge, %147, %154 : vector<1x128xi32>
      %c15_i32_47 = arith.constant 15 : i32
      %156 = vector.broadcast %c15_i32_47 : i32 to vector<1x128xi32>
      %157 = arith.cmpi slt, %147, %156 : vector<1x128xi32>
      %158 = arith.andi %155, %157 : vector<1x128xi1>
      %c0_i32_48 = arith.constant 0 : i32
      %159 = vector.broadcast %c0_i32_48 : i32 to vector<1x128xi32>
      %160 = arith.cmpi sge, %148, %159 : vector<1x128xi32>
      %c16_i32_49 = arith.constant 16 : i32
      %161 = vector.broadcast %c16_i32_49 : i32 to vector<1x128xi32>
      %162 = arith.cmpi slt, %148, %161 : vector<1x128xi32>
      %163 = arith.andi %160, %162 : vector<1x128xi1>
      %c-1_i32_50 = arith.constant -1 : i32
      %164 = vector.broadcast %c-1_i32_50 : i32 to vector<1x128xi32>
      %165 = arith.cmpi sge, %148, %164 : vector<1x128xi32>
      %c15_i32_51 = arith.constant 15 : i32
      %166 = vector.broadcast %c15_i32_51 : i32 to vector<1x128xi32>
      %167 = arith.cmpi slt, %148, %166 : vector<1x128xi32>
      %168 = arith.andi %165, %167 : vector<1x128xi1>
      %169 = arith.andi %153, %163 : vector<1x128xi1>
      %cst_52 = arith.constant 1.000000e+00 : f32
      %170 = vector.broadcast %cst_52 : f32 to vector<1x128xf32>
      %171 = arith.subf %170, %145 : vector<1x128xf32>
      %cst_53 = arith.constant 1.000000e+00 : f32
      %172 = vector.broadcast %cst_53 : f32 to vector<1x128xf32>
      %173 = arith.subf %172, %146 : vector<1x128xf32>
      %174 = arith.mulf %171, %173 : vector<1x128xf32>
      %cst_54 = arith.constant 0.000000e+00 : f32
      %175 = vector.broadcast %cst_54 : f32 to vector<1x128xf32>
      %176 = arith.select %169, %174, %175 : vector<1x128xi1>, vector<1x128xf32>
      %177 = arith.andi %153, %168 : vector<1x128xi1>
      %cst_55 = arith.constant 1.000000e+00 : f32
      %178 = vector.broadcast %cst_55 : f32 to vector<1x128xf32>
      %179 = arith.subf %178, %145 : vector<1x128xf32>
      %180 = arith.mulf %179, %146 : vector<1x128xf32>
      %cst_56 = arith.constant 0.000000e+00 : f32
      %181 = vector.broadcast %cst_56 : f32 to vector<1x128xf32>
      %182 = arith.select %177, %180, %181 : vector<1x128xi1>, vector<1x128xf32>
      %183 = arith.andi %158, %163 : vector<1x128xi1>
      %cst_57 = arith.constant 1.000000e+00 : f32
      %184 = vector.broadcast %cst_57 : f32 to vector<1x128xf32>
      %185 = arith.subf %184, %146 : vector<1x128xf32>
      %186 = arith.mulf %145, %185 : vector<1x128xf32>
      %cst_58 = arith.constant 0.000000e+00 : f32
      %187 = vector.broadcast %cst_58 : f32 to vector<1x128xf32>
      %188 = arith.select %183, %186, %187 : vector<1x128xi1>, vector<1x128xf32>
      %189 = arith.andi %158, %168 : vector<1x128xi1>
      %190 = arith.mulf %145, %146 : vector<1x128xf32>
      %cst_59 = arith.constant 0.000000e+00 : f32
      %191 = vector.broadcast %cst_59 : f32 to vector<1x128xf32>
      %192 = arith.select %189, %190, %191 : vector<1x128xi1>, vector<1x128xf32>
      %c16_i32_60 = arith.constant 16 : i32
      %193 = vector.broadcast %c16_i32_60 : i32 to vector<1x128xi32>
      %194 = arith.muli %147, %193 : vector<1x128xi32>
      %195 = arith.addi %194, %148 : vector<1x128xi32>
      %c0_i32_61 = arith.constant 0 : i32
      %196 = vector.broadcast %c0_i32_61 : i32 to vector<1x128xi32>
      %197 = arith.subi %195, %196 : vector<1x128xi32>
      %198 = tpu.iota {dimensions = array<i32: 0>} : vector<256x128xi32>
      %199 = vector.broadcast %197 : vector<1x128xi32> to vector<256x128xi32>
      %200 = arith.subi %198, %199 : vector<256x128xi32>
      %c0_i32_62 = arith.constant 0 : i32
      %201 = vector.broadcast %c0_i32_62 : i32 to vector<256x128xi32>
      %202 = arith.cmpi eq, %200, %201 : vector<256x128xi32>
      %c16_i32_63 = arith.constant 16 : i32
      %203 = vector.broadcast %c16_i32_63 : i32 to vector<256x128xi32>
      %204 = arith.cmpi eq, %200, %203 : vector<256x128xi32>
      %c1_i32_64 = arith.constant 1 : i32
      %205 = vector.broadcast %c1_i32_64 : i32 to vector<256x128xi32>
      %206 = arith.cmpi eq, %200, %205 : vector<256x128xi32>
      %c17_i32_65 = arith.constant 17 : i32
      %207 = vector.broadcast %c17_i32_65 : i32 to vector<256x128xi32>
      %208 = arith.cmpi eq, %200, %207 : vector<256x128xi32>
      %cst_66 = arith.constant 0.000000e+00 : f32
      %209 = vector.shape_cast %192 : vector<1x128xf32> to vector<1x128xf32>
      %210 = vector.broadcast %209 : vector<1x128xf32> to vector<256x128xf32>
      %211 = vector.broadcast %cst_66 : f32 to vector<256x128xf32>
      %212 = arith.select %208, %210, %211 : vector<256x128xi1>, vector<256x128xf32>
      %213 = vector.shape_cast %182 : vector<1x128xf32> to vector<1x128xf32>
      %214 = vector.broadcast %213 : vector<1x128xf32> to vector<256x128xf32>
      %215 = arith.select %206, %214, %212 : vector<256x128xi1>, vector<256x128xf32>
      %216 = vector.shape_cast %188 : vector<1x128xf32> to vector<1x128xf32>
      %217 = vector.broadcast %216 : vector<1x128xf32> to vector<256x128xf32>
      %218 = arith.select %204, %217, %215 : vector<256x128xi1>, vector<256x128xf32>
      %219 = vector.shape_cast %176 : vector<1x128xf32> to vector<1x128xf32>
      %220 = vector.broadcast %219 : vector<1x128xf32> to vector<256x128xf32>
      %221 = arith.select %202, %220, %218 : vector<256x128xi1>, vector<256x128xf32>
      %cst_67 = arith.constant dense<0.000000e+00> : vector<2x128xf32>
      %222 = tpu.matmul %29, %221, %cst_67 {dimension_numbers = #tpu.dot_dimension_numbers<[1], [0], [0], [1], [0, 0, 1, 1], [], []>} : vector<2x256xf32>, vector<256x128xf32>, vector<2x128xf32> -> vector<2x128xf32>
      %223 = arith.addf %129, %222 : vector<2x128xf32>
      %c0_68 = arith.constant 0 : index
      %c128 = arith.constant 128 : index
      %224 = vector.load %arg5[%c0_68, %c128] : memref<2x256xf32, #tpu.memory_space<vmem>>, vector<2x128xf32>
      tpu.vector_store %arg5[%c0_68, %c128], %223 {strides = array<i32>} : memref<2x256xf32, #tpu.memory_space<vmem>>, vector<2x128xf32>,
      %c0_69 = arith.constant 0 : index
      %c0_70 = arith.constant 0 : index
      %c128_71 = arith.constant 128 : index
      %225 = vector.load %arg3[%c0_69, %c0_70, %c128_71] : memref<1x2x256xf32, #tpu.memory_space<vmem>>, vector<1x2x128xf32>
      %226 = vector.shape_cast %225 : vector<1x2x128xf32> to vector<2x128xf32>
      %227 = vector.shape_cast %223 : vector<2x128xf32> to vector<1x2x128xf32>
      tpu.vector_store %arg3[%c0_69, %c0_70, %c128_71], %227 {strides = array<i32>} : memref<1x2x256xf32, #tpu.memory_space<vmem>>, vector<1x2x128xf32>,
    } else {
    }
    %c2_i32_7 = arith.constant 2 : i32
    %c0_i32_8 = arith.constant 0 : i32
    %16 = arith.cmpi eq, %c2_i32_7, %c0_i32_8 : i32
    %c1_i32_9 = arith.constant 1 : i32
    %17 = arith.select %16, %c1_i32_9, %c2_i32_7 : i32
    %18 = arith.remsi %arg1, %17 : i32
    %c0_i32_10 = arith.constant 0 : i32
    %19 = arith.cmpi ne, %18, %c0_i32_10 : i32
    %c0_i32_11 = arith.constant 0 : i32
    %20 = arith.cmpi slt, %18, %c0_i32_11 : i32
    %c0_i32_12 = arith.constant 0 : i32
    %21 = arith.cmpi slt, %17, %c0_i32_12 : i32
    %22 = arith.xori %20, %21 : i1
    %23 = arith.andi %22, %19 : i1
    %24 = arith.addi %18, %17 : i32
    %25 = arith.select %23, %24, %18 : i32
    %c1_i32_13 = arith.constant 1 : i32
    %26 = arith.cmpi eq, %25, %c1_i32_13 : i32
    %27 = arith.extui %26 : i1 to i32
    %c0_i32_14 = arith.constant 0 : i32
    %28 = arith.cmpi ne, %27, %c0_i32_14 : i32
    scf.if %28 {
      %c0 = arith.constant 0 : index
      %c0_15 = arith.constant 0 : index
      %29 = vector.load %arg5[%c0, %c0_15] : memref<2x256xf32, #tpu.memory_space<vmem>>, vector<2x256xf32>
      %30 = vector.extract_strided_slice %29 {offsets = [0, 0], sizes = [2, 128], strides = [1, 1]} : vector<2x256xf32> to vector<2x128xf32>
      %31 = tpu.iota {dimensions = array<i32: 1>} : vector<1x128xi32>
      %c0_i32_16 = arith.constant 0 : i32
      %32 = vector.broadcast %c0_i32_16 : i32 to vector<1x128xi32>
      %33 = arith.addi %32, %31 : vector<1x128xi32>
      %34 = vector.extract_strided_slice %30 {offsets = [0, 0], sizes = [1, 128], strides = [1, 1]} : vector<2x128xf32> to vector<1x128xf32>
      %35 = vector.extract_strided_slice %30 {offsets = [1, 0], sizes = [1, 128], strides = [1, 1]} : vector<2x128xf32> to vector<1x128xf32>
      %c4_i32 = arith.constant 4 : i32
      %36 = vector.broadcast %c4_i32 : i32 to vector<1x128xi32>
      %37 = arith.shrsi %33, %36 : vector<1x128xi32>
      %c15_i32 = arith.constant 15 : i32
      %38 = vector.broadcast %c15_i32 : i32 to vector<1x128xi32>
      %39 = arith.andi %33, %38 : vector<1x128xi32>
      %40 = arith.sitofp %37 : vector<1x128xi32> to vector<1x128xf32>
      %41 = arith.addf %40, %34 : vector<1x128xf32>
      %42 = arith.sitofp %39 : vector<1x128xi32> to vector<1x128xf32>
      %43 = arith.addf %42, %35 : vector<1x128xf32>
      %44 = math.floor %41 : vector<1x128xf32>
      %45 = math.floor %43 : vector<1x128xf32>
      %46 = arith.subf %41, %44 : vector<1x128xf32>
      %47 = arith.subf %43, %45 : vector<1x128xf32>
      %48 = arith.fptosi %44 : vector<1x128xf32> to vector<1x128xi32>
      %49 = arith.fptosi %45 : vector<1x128xf32> to vector<1x128xi32>
      %c0_i32_17 = arith.constant 0 : i32
      %50 = vector.broadcast %c0_i32_17 : i32 to vector<1x128xi32>
      %51 = arith.cmpi sge, %48, %50 : vector<1x128xi32>
      %c16_i32 = arith.constant 16 : i32
      %52 = vector.broadcast %c16_i32 : i32 to vector<1x128xi32>
      %53 = arith.cmpi slt, %48, %52 : vector<1x128xi32>
      %54 = arith.andi %51, %53 : vector<1x128xi1>
      %c-1_i32 = arith.constant -1 : i32
      %55 = vector.broadcast %c-1_i32 : i32 to vector<1x128xi32>
      %56 = arith.cmpi sge, %48, %55 : vector<1x128xi32>
      %c15_i32_18 = arith.constant 15 : i32
      %57 = vector.broadcast %c15_i32_18 : i32 to vector<1x128xi32>
      %58 = arith.cmpi slt, %48, %57 : vector<1x128xi32>
      %59 = arith.andi %56, %58 : vector<1x128xi1>
      %c0_i32_19 = arith.constant 0 : i32
      %60 = vector.broadcast %c0_i32_19 : i32 to vector<1x128xi32>
      %61 = arith.cmpi sge, %49, %60 : vector<1x128xi32>
      %c16_i32_20 = arith.constant 16 : i32
      %62 = vector.broadcast %c16_i32_20 : i32 to vector<1x128xi32>
      %63 = arith.cmpi slt, %49, %62 : vector<1x128xi32>
      %64 = arith.andi %61, %63 : vector<1x128xi1>
      %c-1_i32_21 = arith.constant -1 : i32
      %65 = vector.broadcast %c-1_i32_21 : i32 to vector<1x128xi32>
      %66 = arith.cmpi sge, %49, %65 : vector<1x128xi32>
      %c15_i32_22 = arith.constant 15 : i32
      %67 = vector.broadcast %c15_i32_22 : i32 to vector<1x128xi32>
      %68 = arith.cmpi slt, %49, %67 : vector<1x128xi32>
      %69 = arith.andi %66, %68 : vector<1x128xi1>
      %70 = arith.andi %54, %64 : vector<1x128xi1>
      %cst = arith.constant 1.000000e+00 : f32
      %71 = vector.broadcast %cst : f32 to vector<1x128xf32>
      %72 = arith.subf %71, %46 : vector<1x128xf32>
      %cst_23 = arith.constant 1.000000e+00 : f32
      %73 = vector.broadcast %cst_23 : f32 to vector<1x128xf32>
      %74 = arith.subf %73, %47 : vector<1x128xf32>
      %75 = arith.mulf %72, %74 : vector<1x128xf32>
      %cst_24 = arith.constant 0.000000e+00 : f32
      %76 = vector.broadcast %cst_24 : f32 to vector<1x128xf32>
      %77 = arith.select %70, %75, %76 : vector<1x128xi1>, vector<1x128xf32>
      %78 = arith.andi %54, %69 : vector<1x128xi1>
      %cst_25 = arith.constant 1.000000e+00 : f32
      %79 = vector.broadcast %cst_25 : f32 to vector<1x128xf32>
      %80 = arith.subf %79, %46 : vector<1x128xf32>
      %81 = arith.mulf %80, %47 : vector<1x128xf32>
      %cst_26 = arith.constant 0.000000e+00 : f32
      %82 = vector.broadcast %cst_26 : f32 to vector<1x128xf32>
      %83 = arith.select %78, %81, %82 : vector<1x128xi1>, vector<1x128xf32>
      %84 = arith.andi %59, %64 : vector<1x128xi1>
      %cst_27 = arith.constant 1.000000e+00 : f32
      %85 = vector.broadcast %cst_27 : f32 to vector<1x128xf32>
      %86 = arith.subf %85, %47 : vector<1x128xf32>
      %87 = arith.mulf %46, %86 : vector<1x128xf32>
      %cst_28 = arith.constant 0.000000e+00 : f32
      %88 = vector.broadcast %cst_28 : f32 to vector<1x128xf32>
      %89 = arith.select %84, %87, %88 : vector<1x128xi1>, vector<1x128xf32>
      %90 = arith.andi %59, %69 : vector<1x128xi1>
      %91 = arith.mulf %46, %47 : vector<1x128xf32>
      %cst_29 = arith.constant 0.000000e+00 : f32
      %92 = vector.broadcast %cst_29 : f32 to vector<1x128xf32>
      %93 = arith.select %90, %91, %92 : vector<1x128xi1>, vector<1x128xf32>
      %c16_i32_30 = arith.constant 16 : i32
      %94 = vector.broadcast %c16_i32_30 : i32 to vector<1x128xi32>
      %95 = arith.muli %48, %94 : vector<1x128xi32>
      %96 = arith.addi %95, %49 : vector<1x128xi32>
      %c0_i32_31 = arith.constant 0 : i32
      %97 = vector.broadcast %c0_i32_31 : i32 to vector<1x128xi32>
      %98 = arith.subi %96, %97 : vector<1x128xi32>
      %99 = tpu.iota {dimensions = array<i32: 0>} : vector<256x128xi32>
      %100 = vector.broadcast %98 : vector<1x128xi32> to vector<256x128xi32>
      %101 = arith.subi %99, %100 : vector<256x128xi32>
      %c0_i32_32 = arith.constant 0 : i32
      %102 = vector.broadcast %c0_i32_32 : i32 to vector<256x128xi32>
      %103 = arith.cmpi eq, %101, %102 : vector<256x128xi32>
      %c16_i32_33 = arith.constant 16 : i32
      %104 = vector.broadcast %c16_i32_33 : i32 to vector<256x128xi32>
      %105 = arith.cmpi eq, %101, %104 : vector<256x128xi32>
      %c1_i32_34 = arith.constant 1 : i32
      %106 = vector.broadcast %c1_i32_34 : i32 to vector<256x128xi32>
      %107 = arith.cmpi eq, %101, %106 : vector<256x128xi32>
      %c17_i32 = arith.constant 17 : i32
      %108 = vector.broadcast %c17_i32 : i32 to vector<256x128xi32>
      %109 = arith.cmpi eq, %101, %108 : vector<256x128xi32>
      %cst_35 = arith.constant 0.000000e+00 : f32
      %110 = vector.shape_cast %93 : vector<1x128xf32> to vector<1x128xf32>
      %111 = vector.broadcast %110 : vector<1x128xf32> to vector<256x128xf32>
      %112 = vector.broadcast %cst_35 : f32 to vector<256x128xf32>
      %113 = arith.select %109, %111, %112 : vector<256x128xi1>, vector<256x128xf32>
      %114 = vector.shape_cast %83 : vector<1x128xf32> to vector<1x128xf32>
      %115 = vector.broadcast %114 : vector<1x128xf32> to vector<256x128xf32>
      %116 = arith.select %107, %115, %113 : vector<256x128xi1>, vector<256x128xf32>
      %117 = vector.shape_cast %89 : vector<1x128xf32> to vector<1x128xf32>
      %118 = vector.broadcast %117 : vector<1x128xf32> to vector<256x128xf32>
      %119 = arith.select %105, %118, %116 : vector<256x128xi1>, vector<256x128xf32>
      %120 = vector.shape_cast %77 : vector<1x128xf32> to vector<1x128xf32>
      %121 = vector.broadcast %120 : vector<1x128xf32> to vector<256x128xf32>
      %122 = arith.select %103, %121, %119 : vector<256x128xi1>, vector<256x128xf32>
      %cst_36 = arith.constant dense<0.000000e+00> : vector<2x128xf32>
      %123 = tpu.matmul %29, %122, %cst_36 {dimension_numbers = #tpu.dot_dimension_numbers<[1], [0], [0], [1], [0, 0, 1, 1], [], []>} : vector<2x256xf32>, vector<256x128xf32>, vector<2x128xf32> -> vector<2x128xf32>
      %124 = arith.addf %30, %123 : vector<2x128xf32>
      %c0_37 = arith.constant 0 : index
      %c0_38 = arith.constant 0 : index
      %125 = vector.load %arg4[%c0_37, %c0_38] : memref<2x256xf32, #tpu.memory_space<vmem>>, vector<2x128xf32>
      tpu.vector_store %arg4[%c0_37, %c0_38], %124 {strides = array<i32>} : memref<2x256xf32, #tpu.memory_space<vmem>>, vector<2x128xf32>,
      %c0_39 = arith.constant 0 : index
      %c0_40 = arith.constant 0 : index
      %c0_41 = arith.constant 0 : index
      %126 = vector.load %arg3[%c0_39, %c0_40, %c0_41] : memref<1x2x256xf32, #tpu.memory_space<vmem>>, vector<1x2x128xf32>
      %127 = vector.shape_cast %126 : vector<1x2x128xf32> to vector<2x128xf32>
      %128 = vector.shape_cast %124 : vector<2x128xf32> to vector<1x2x128xf32>
      tpu.vector_store %arg3[%c0_39, %c0_40, %c0_41], %128 {strides = array<i32>} : memref<1x2x256xf32, #tpu.memory_space<vmem>>, vector<1x2x128xf32>,
      %129 = vector.extract_strided_slice %29 {offsets = [0, 128], sizes = [2, 128], strides = [1, 1]} : vector<2x256xf32> to vector<2x128xf32>
      %130 = tpu.iota {dimensions = array<i32: 1>} : vector<1x128xi32>
      %c128_i32 = arith.constant 128 : i32
      %131 = vector.broadcast %c128_i32 : i32 to vector<1x128xi32>
      %132 = arith.addi %131, %130 : vector<1x128xi32>
      %133 = vector.extract_strided_slice %129 {offsets = [0, 0], sizes = [1, 128], strides = [1, 1]} : vector<2x128xf32> to vector<1x128xf32>
      %134 = vector.extract_strided_slice %129 {offsets = [1, 0], sizes = [1, 128], strides = [1, 1]} : vector<2x128xf32> to vector<1x128xf32>
      %c4_i32_42 = arith.constant 4 : i32
      %135 = vector.broadcast %c4_i32_42 : i32 to vector<1x128xi32>
      %136 = arith.shrsi %132, %135 : vector<1x128xi32>
      %c15_i32_43 = arith.constant 15 : i32
      %137 = vector.broadcast %c15_i32_43 : i32 to vector<1x128xi32>
      %138 = arith.andi %132, %137 : vector<1x128xi32>
      %139 = arith.sitofp %136 : vector<1x128xi32> to vector<1x128xf32>
      %140 = arith.addf %139, %133 : vector<1x128xf32>
      %141 = arith.sitofp %138 : vector<1x128xi32> to vector<1x128xf32>
      %142 = arith.addf %141, %134 : vector<1x128xf32>
      %143 = math.floor %140 : vector<1x128xf32>
      %144 = math.floor %142 : vector<1x128xf32>
      %145 = arith.subf %140, %143 : vector<1x128xf32>
      %146 = arith.subf %142, %144 : vector<1x128xf32>
      %147 = arith.fptosi %143 : vector<1x128xf32> to vector<1x128xi32>
      %148 = arith.fptosi %144 : vector<1x128xf32> to vector<1x128xi32>
      %c0_i32_44 = arith.constant 0 : i32
      %149 = vector.broadcast %c0_i32_44 : i32 to vector<1x128xi32>
      %150 = arith.cmpi sge, %147, %149 : vector<1x128xi32>
      %c16_i32_45 = arith.constant 16 : i32
      %151 = vector.broadcast %c16_i32_45 : i32 to vector<1x128xi32>
      %152 = arith.cmpi slt, %147, %151 : vector<1x128xi32>
      %153 = arith.andi %150, %152 : vector<1x128xi1>
      %c-1_i32_46 = arith.constant -1 : i32
      %154 = vector.broadcast %c-1_i32_46 : i32 to vector<1x128xi32>
      %155 = arith.cmpi sge, %147, %154 : vector<1x128xi32>
      %c15_i32_47 = arith.constant 15 : i32
      %156 = vector.broadcast %c15_i32_47 : i32 to vector<1x128xi32>
      %157 = arith.cmpi slt, %147, %156 : vector<1x128xi32>
      %158 = arith.andi %155, %157 : vector<1x128xi1>
      %c0_i32_48 = arith.constant 0 : i32
      %159 = vector.broadcast %c0_i32_48 : i32 to vector<1x128xi32>
      %160 = arith.cmpi sge, %148, %159 : vector<1x128xi32>
      %c16_i32_49 = arith.constant 16 : i32
      %161 = vector.broadcast %c16_i32_49 : i32 to vector<1x128xi32>
      %162 = arith.cmpi slt, %148, %161 : vector<1x128xi32>
      %163 = arith.andi %160, %162 : vector<1x128xi1>
      %c-1_i32_50 = arith.constant -1 : i32
      %164 = vector.broadcast %c-1_i32_50 : i32 to vector<1x128xi32>
      %165 = arith.cmpi sge, %148, %164 : vector<1x128xi32>
      %c15_i32_51 = arith.constant 15 : i32
      %166 = vector.broadcast %c15_i32_51 : i32 to vector<1x128xi32>
      %167 = arith.cmpi slt, %148, %166 : vector<1x128xi32>
      %168 = arith.andi %165, %167 : vector<1x128xi1>
      %169 = arith.andi %153, %163 : vector<1x128xi1>
      %cst_52 = arith.constant 1.000000e+00 : f32
      %170 = vector.broadcast %cst_52 : f32 to vector<1x128xf32>
      %171 = arith.subf %170, %145 : vector<1x128xf32>
      %cst_53 = arith.constant 1.000000e+00 : f32
      %172 = vector.broadcast %cst_53 : f32 to vector<1x128xf32>
      %173 = arith.subf %172, %146 : vector<1x128xf32>
      %174 = arith.mulf %171, %173 : vector<1x128xf32>
      %cst_54 = arith.constant 0.000000e+00 : f32
      %175 = vector.broadcast %cst_54 : f32 to vector<1x128xf32>
      %176 = arith.select %169, %174, %175 : vector<1x128xi1>, vector<1x128xf32>
      %177 = arith.andi %153, %168 : vector<1x128xi1>
      %cst_55 = arith.constant 1.000000e+00 : f32
      %178 = vector.broadcast %cst_55 : f32 to vector<1x128xf32>
      %179 = arith.subf %178, %145 : vector<1x128xf32>
      %180 = arith.mulf %179, %146 : vector<1x128xf32>
      %cst_56 = arith.constant 0.000000e+00 : f32
      %181 = vector.broadcast %cst_56 : f32 to vector<1x128xf32>
      %182 = arith.select %177, %180, %181 : vector<1x128xi1>, vector<1x128xf32>
      %183 = arith.andi %158, %163 : vector<1x128xi1>
      %cst_57 = arith.constant 1.000000e+00 : f32
      %184 = vector.broadcast %cst_57 : f32 to vector<1x128xf32>
      %185 = arith.subf %184, %146 : vector<1x128xf32>
      %186 = arith.mulf %145, %185 : vector<1x128xf32>
      %cst_58 = arith.constant 0.000000e+00 : f32
      %187 = vector.broadcast %cst_58 : f32 to vector<1x128xf32>
      %188 = arith.select %183, %186, %187 : vector<1x128xi1>, vector<1x128xf32>
      %189 = arith.andi %158, %168 : vector<1x128xi1>
      %190 = arith.mulf %145, %146 : vector<1x128xf32>
      %cst_59 = arith.constant 0.000000e+00 : f32
      %191 = vector.broadcast %cst_59 : f32 to vector<1x128xf32>
      %192 = arith.select %189, %190, %191 : vector<1x128xi1>, vector<1x128xf32>
      %c16_i32_60 = arith.constant 16 : i32
      %193 = vector.broadcast %c16_i32_60 : i32 to vector<1x128xi32>
      %194 = arith.muli %147, %193 : vector<1x128xi32>
      %195 = arith.addi %194, %148 : vector<1x128xi32>
      %c0_i32_61 = arith.constant 0 : i32
      %196 = vector.broadcast %c0_i32_61 : i32 to vector<1x128xi32>
      %197 = arith.subi %195, %196 : vector<1x128xi32>
      %198 = tpu.iota {dimensions = array<i32: 0>} : vector<256x128xi32>
      %199 = vector.broadcast %197 : vector<1x128xi32> to vector<256x128xi32>
      %200 = arith.subi %198, %199 : vector<256x128xi32>
      %c0_i32_62 = arith.constant 0 : i32
      %201 = vector.broadcast %c0_i32_62 : i32 to vector<256x128xi32>
      %202 = arith.cmpi eq, %200, %201 : vector<256x128xi32>
      %c16_i32_63 = arith.constant 16 : i32
      %203 = vector.broadcast %c16_i32_63 : i32 to vector<256x128xi32>
      %204 = arith.cmpi eq, %200, %203 : vector<256x128xi32>
      %c1_i32_64 = arith.constant 1 : i32
      %205 = vector.broadcast %c1_i32_64 : i32 to vector<256x128xi32>
      %206 = arith.cmpi eq, %200, %205 : vector<256x128xi32>
      %c17_i32_65 = arith.constant 17 : i32
      %207 = vector.broadcast %c17_i32_65 : i32 to vector<256x128xi32>
      %208 = arith.cmpi eq, %200, %207 : vector<256x128xi32>
      %cst_66 = arith.constant 0.000000e+00 : f32
      %209 = vector.shape_cast %192 : vector<1x128xf32> to vector<1x128xf32>
      %210 = vector.broadcast %209 : vector<1x128xf32> to vector<256x128xf32>
      %211 = vector.broadcast %cst_66 : f32 to vector<256x128xf32>
      %212 = arith.select %208, %210, %211 : vector<256x128xi1>, vector<256x128xf32>
      %213 = vector.shape_cast %182 : vector<1x128xf32> to vector<1x128xf32>
      %214 = vector.broadcast %213 : vector<1x128xf32> to vector<256x128xf32>
      %215 = arith.select %206, %214, %212 : vector<256x128xi1>, vector<256x128xf32>
      %216 = vector.shape_cast %188 : vector<1x128xf32> to vector<1x128xf32>
      %217 = vector.broadcast %216 : vector<1x128xf32> to vector<256x128xf32>
      %218 = arith.select %204, %217, %215 : vector<256x128xi1>, vector<256x128xf32>
      %219 = vector.shape_cast %176 : vector<1x128xf32> to vector<1x128xf32>
      %220 = vector.broadcast %219 : vector<1x128xf32> to vector<256x128xf32>
      %221 = arith.select %202, %220, %218 : vector<256x128xi1>, vector<256x128xf32>
      %cst_67 = arith.constant dense<0.000000e+00> : vector<2x128xf32>
      %222 = tpu.matmul %29, %221, %cst_67 {dimension_numbers = #tpu.dot_dimension_numbers<[1], [0], [0], [1], [0, 0, 1, 1], [], []>} : vector<2x256xf32>, vector<256x128xf32>, vector<2x128xf32> -> vector<2x128xf32>
      %223 = arith.addf %129, %222 : vector<2x128xf32>
      %c0_68 = arith.constant 0 : index
      %c128 = arith.constant 128 : index
      %224 = vector.load %arg4[%c0_68, %c128] : memref<2x256xf32, #tpu.memory_space<vmem>>, vector<2x128xf32>
      tpu.vector_store %arg4[%c0_68, %c128], %223 {strides = array<i32>} : memref<2x256xf32, #tpu.memory_space<vmem>>, vector<2x128xf32>,
      %c0_69 = arith.constant 0 : index
      %c0_70 = arith.constant 0 : index
      %c128_71 = arith.constant 128 : index
      %225 = vector.load %arg3[%c0_69, %c0_70, %c128_71] : memref<1x2x256xf32, #tpu.memory_space<vmem>>, vector<1x2x128xf32>
      %226 = vector.shape_cast %225 : vector<1x2x128xf32> to vector<2x128xf32>
      %227 = vector.shape_cast %223 : vector<2x128xf32> to vector<1x2x128xf32>
      tpu.vector_store %arg3[%c0_69, %c0_70, %c128_71], %227 {strides = array<i32>} : memref<1x2x256xf32, #tpu.memory_space<vmem>>, vector<1x2x128xf32>,
    } else {
    }
    return
  }
  func.func @transform_0(%arg0: i32, %arg1: i32) -> (i32, i32, i32) {
    %c0_i32 = arith.constant 0 : i32
    %c0_i32_0 = arith.constant 0 : i32
    %c0_i32_1 = arith.constant 0 : i32
    return %arg0, %c0_i32, %c0_i32_0 : i32, i32, i32
  }
  func.func @transform_1(%arg0: i32, %arg1: i32) -> (i32, i32, i32) {
    %c0_i32 = arith.constant 0 : i32
    %c0_i32_0 = arith.constant 0 : i32
    %c0_i32_1 = arith.constant 0 : i32
    return %arg0, %c0_i32, %c0_i32_0 : i32, i32, i32
  }
}

</mosaic_0001>

<llo_original>
// kernel: dvf2ddf.1
$region0: #{dvf2ddf.1}
  #allocation0 [shape = 'u32[]', space=smem, size = 0x4, offset = 0x4, fixed_abs, tag = 'smem constant byte address 0x4 - core index']
  #allocation1 [shape = 'u32[72,128]{1,0:T(1,128)}', space=vmem, size = 0x9000, scoped, tag = 'internal scratch']
  #allocation2 [shape = 'f32[2,256]{1,0:T(2,128)}', space=vmem, size = 0x800, scoped, tag = 'scratch operand']
  #allocation3 [shape = 'f32[2,256]{1,0:T(2,128)}', space=vmem, size = 0x800, scoped, tag = 'scratch operand']
  %s0 = inlined_call_operand.vmem [shape: f32[2,2,256], index: 0, kind: input, shape index: {}]
  %s1 = inlined_call_operand.vmem [shape: f32[2,2,256], index: 1, kind: output, shape index: {}]
  %s2 = sld [smem:[#allocation0]]
  $region49: #{dvf2ddf.1} parent=0
    _
  %s4 = ssub.s32 1, %s2
  %s5 = scalar_select 0, %s4, %s2
  loop: start=0, step=1, limit=16
  $region2: #{dvf2ddf.1} parent=0 // loop_pre_header
    _
  $region3: #{dvf2ddf.1} parent=0 // loop_header
    %s7 = sphi 0, %s11
    %p8 = scmp.ge.s32.totalorder %s7, 16
    %s14 = sphi 0, %s26
    %s15 = sphi 0, %s22
    %s16 = sphi 0, %s14
    %s17 = sphi 0, %s15
    %s18 = sphi 0, %s16
    %s19 = sphi 0, %s17
    %s29 = sphi 0, %s31
    %s32 = sphi 0, %s29
    %s33 = sphi 0, %s32
    %s49 = sphi 0, %s33
    %s55 = sphi 0, %s57
    %s58 = sphi 0, %s55
    %s59 = sphi 0, %s58
    %s75 = sphi 0, %s59
  $region4: #{dvf2ddf.1} parent=0 // loop_header_branch
    %10 = sbr.rel (%p8) target = $region8
  $region5: #{dvf2ddf.1} parent=0 // loop_body
    %s12 = ssub.s32 %s7, 1
    %s13 = ssub.s32 %s7, 2
    %s20 = sadd.s32 1, %s15
    %p21 = scmp.ge.s32.totalorder %s20, 7
    %s22 = scalar_select %p21, 0, %s20
    %s23 = sadd.s32 1, %s14
    %s24 = scalar_select %p21, %s23, %s14
    %p25 = scmp.ge.s32.totalorder %s24, 2
    %s26 = scalar_select %p25, 0, %s24
    %s27 = ssub.s32 %s14, %s26
    %p28 = scmp.eq.s32.totalorder %s27, 0
    %s30 = sadd.s32 %s29, 1
    %s31 = scalar_select %p28, %s29, %s30
    %p34 = pneg %p28
    %p35 = scmp.eq.s32.totalorder %s7, 13
    %p36 = por %p34, %p35
    %p37 = scmp.ne.s32.totalorder %s29, %s32
    %p38 = scmp.eq.s32.totalorder %s7, 0
    %p39 = por %p37, %p38
    %p40 = scmp.ne.s32.totalorder %s29, %s32
    %p41 = scmp.eq.s32.totalorder %s12, 13
    %p42 = por %p40, %p41
    %p43 = scmp.ne.s32.totalorder %s32, %s33
    %p44 = scmp.eq.s32.totalorder %s12, 0
    %p45 = por %p43, %p44
    %p46 = scmp.ne.s32.totalorder %s32, %s33
    %p47 = scmp.eq.s32.totalorder %s13, 13
    %p48 = por %p46, %p47
    %p50 = scmp.ne.s32.totalorder %s33, %s49
    %p51 = scmp.eq.s32.totalorder %s13, 0
    %p52 = por %p50, %p51
    %s53 = ssub.s32 %s14, %s26
    %p54 = scmp.eq.s32.totalorder %s53, 0
    %s56 = sadd.s32 %s55, 1
    %s57 = scalar_select %p54, %s55, %s56
    %p60 = pneg %p54
    %p61 = scmp.eq.s32.totalorder %s7, 13
    %p62 = por %p60, %p61
    %p63 = scmp.ne.s32.totalorder %s55, %s58
    %p64 = scmp.eq.s32.totalorder %s7, 0
    %p65 = por %p63, %p64
    %p66 = scmp.ne.s32.totalorder %s55, %s58
    %p67 = scmp.eq.s32.totalorder %s12, 13
    %p68 = por %p66, %p67
    %p69 = scmp.ne.s32.totalorder %s58, %s59
    %p70 = scmp.eq.s32.totalorder %s12, 0
    %p71 = por %p69, %p70
    %p72 = scmp.ne.s32.totalorder %s58, %s59
    %p73 = scmp.eq.s32.totalorder %s13, 13
    %p74 = por %p72, %p73
    %p76 = scmp.ne.s32.totalorder %s59, %s75
    %p77 = scmp.eq.s32.totalorder %s13, 0
    %p78 = por %p76, %p77
    %p79 = scmp.le.s32.totalorder 1, %s7
    %p80 = scmp.lt.s32.totalorder %s7, 15
    %p81 = pnand %p79, %p80
    %p82 = pneg %p81
    // Predicated region
    $region9: #{dvf2ddf.1} parent=5 // pred_check
      _
    $region10: #{dvf2ddf.1} parent=5 // pred_check_branch
      %84 = sbr.rel (%p81) target = $region12
    $region11: #{dvf2ddf.1} parent=5 // pred_region
      %s85 = ssub.s32 %s7, 1
    $region12: #{dvf2ddf.1} parent=5 // pred_fallthru
      _
    %p86 = scmp.lt.s32.totalorder %s7, 14
    // Predicated region
    $region13: #{dvf2ddf.1} parent=5 // pred_check
      %p87 = pneg %p86
    $region14: #{dvf2ddf.1} parent=5 // pred_check_branch
      %89 = sbr.rel (%p87) target = $region16
    $region15: #{dvf2ddf.1} parent=5 // pred_region
      // Predicated region
      $region17: #{dvf2ddf.1} parent=15 // pred_check
        %p90 = pneg %p39
      $region18: #{dvf2ddf.1} parent=15 // pred_check_branch
        %92 = sbr.rel (%p90) target = $region20
      $region19: #{dvf2ddf.1} parent=15 // pred_region
        %p93 = scmp.lt.s32.totalorder %s14, 1
        %s94 = scalar_select %p93, %s14, 1
        %s95 = smul.addr %s94, 2
        %s96 = smul.addr %s95, 2
        %s97 = scalar_lea.vmem %s0, %s96
      $region20: #{dvf2ddf.1} parent=15 // pred_fallthru
        _
    $region16: #{dvf2ddf.1} parent=5 // pred_fallthru
      _
    %p98 = scmp.le.s32.totalorder 1, %s7
    %p99 = scmp.lt.s32.totalorder %s7, 15
    %p100 = pnand %p98, %p99
    %p101 = pneg %p100
    // Predicated region
    $region21: #{dvf2ddf.1} parent=5 // pred_check
      _
    $region22: #{dvf2ddf.1} parent=5 // pred_check_branch
      %103 = sbr.rel (%p100) target = $region24
    $region23: #{dvf2ddf.1} parent=5 // pred_region
      %s104 = ssub.s32 %s7, 1
      %p105 = scmp.lt.s32.totalorder %s16, 1
      %s106 = scalar_select %p105, %s16, 1
      %s107 = smul.addr %s106, 2
      %s108 = smul.addr %s107, 2
      %s109 = scalar_lea.vmem %s0, %s108
      %p110 = pneg %p45
      %p111 = pneg %p42
      %p112 = pneg %p71
      %p113 = pneg %p68
      %p114 = scmp.lt.s32.totalorder %s16, 1
      %s115 = scalar_select %p114, %s16, 1
      %s116 = smul.addr %s115, 2
      %s117 = smul.addr %s116, 2
      %s118 = scalar_lea.vmem %s1, %s117
      %p119 = scmp.lt.s32.totalorder %s16, 1
      %s120 = scalar_select %p119, %s16, 1
      %s121 = smul.addr %s120, 2
      %s122 = smul.addr %s121, 2
      %s123 = scalar_lea.vmem %s0, %s122
      %p124 = scmp.lt.s32.totalorder %s16, 1
      %s125 = scalar_select %p124, %s16, 1
      %s126 = smul.addr %s125, 2
      %s127 = smul.addr %s126, 2
      %s128 = scalar_lea.vmem %s1, %s127
      %p129 = scmp.eq.s32.totalorder %s17, 0
      // Predicated region
      $region25: #{dvf2ddf.1} parent=23 // pred_check
        %p130 = pneg %p129
      $region26: #{dvf2ddf.1} parent=23 // pred_check_branch
        %132 = sbr.rel (%p130) target = $region28
      $region27: #{dvf2ddf.1} parent=23 // pred_region
        %v133 = vld [vmem:[%s123] sm:$0xf]
        %v134 = vmul.f32 %v133, 0.0078125
        %135 = vst [vmem:[#allocation2] sm:$0xf] %v134
      $region28: #{dvf2ddf.1} parent=23 // pred_fallthru
        _
      %p136 = scmp.lt.s32.totalorder %s17, 0
      %s137 = ssub.s32 0, %s17
      %s138 = scalar_select %p136, %s137, %s17
      %s139 = sand.u32 %s138, 1
      %s140 = ssub.s32 0, %s139
      %s141 = scalar_select %p136, %s140, %s139
      %p142 = scmp.ne.s32.totalorder %s141, 0
      %p143 = scmp.lt.s32.totalorder %s141, 0
      %p144 = pnand %p143, %p142
      %p145 = pneg %p144
      %s146 = sadd.s32 %s141, 2
      %s147 = scalar_select %p145, %s146, %s141
      %p148 = scmp.eq.s32.totalorder %s147, 0
      // Predicated region
      $region29: #{dvf2ddf.1} parent=23 // pred_check
        %p149 = pneg %p148
      $region30: #{dvf2ddf.1} parent=23 // pred_check_branch
        %151 = sbr.rel (%p149) target = $region32
      $region31: #{dvf2ddf.1} parent=23 // pred_region
        %v152 = vld [vmem:[#allocation2] sm:$0xf]
        %v153 = vlaneseq
        %v154 = vand.u32 %v153, 127
        %v155 = vshra.s32 %v154, 4
        %v156 = vand.u32 %v154, 15
        %v157 = vcvt.s32.f32 %v155
        %v158 = vadd.f32 %v157, %v152
        %v159 = vcvt.s32.f32 %v156
        %v161 = vperm.slane %v152, 1
        %v163 = vadd.f32 %v159, %v161
        %v164 = vfloor.f32 %v158
        %v165 = vfloor.f32 %v163
        %v166 = vsub.f32 %v158, %v164
        %v167 = vsub.f32 %v163, %v165
        %v168 = vcvt.f32.s32.to.zero.pseudo %v164
        %v169 = vcvt.f32.s32.to.zero.pseudo %v165
        %vm170 = vcmp.ge.s32.totalorder %v168, 0
        %vm171 = vcmp.lt.s32.totalorder %v168, 16
        %vm172 = vmand %vm170, %vm171
        %vm173 = vcmp.ge.s32.totalorder %v168, 4294967295
        %vm174 = vcmp.lt.s32.totalorder %v168, 15
        %vm175 = vmand %vm173, %vm174
        %vm176 = vcmp.ge.s32.totalorder %v169, 0
        %vm177 = vcmp.lt.s32.totalorder %v169, 16
        %vm178 = vmand %vm176, %vm177
        %vm179 = vcmp.ge.s32.totalorder %v169, 4294967295
        %vm180 = vcmp.lt.s32.totalorder %v169, 15
        %vm181 = vmand %vm179, %vm180
        %vm182 = vmand %vm172, %vm178
        %v183 = vsub.f32 1.0, %v166
        %v184 = vsub.f32 1.0, %v167
        %v185 = vmul.f32 %v183, %v184
        %v186 = vsel %vm182, %v185, 0.0
        %vm187 = vmand %vm172, %vm181
        %v188 = vmul.f32 %v183, %v167
        %v189 = vsel %vm187, %v188, 0.0
        %vm190 = vmand %vm175, %vm178
        %v191 = vmul.f32 %v166, %v184
        %v192 = vsel %vm190, %v191, 0.0
        %vm193 = vmand %vm175, %vm181
        %v194 = vmul.f32 %v166, %v167
        %v195 = vsel %vm193, %v194, 0.0
        %v196 = vmul.u32 %v168, 16
        %v197 = vadd.s32 %v196, %v169
        %v198 = vlaneseq
        %v199 = vshrl.u32 %v198, 7
        %v200 = vadd.s32 %v199, 8
        %v201 = vadd.s32 %v199, 16
        %v202 = vadd.s32 %v199, 24
        %v203 = vadd.s32 %v199, 32
        %v204 = vadd.s32 %v199, 40
        %v205 = vadd.s32 %v199, 48
        %v206 = vadd.s32 %v199, 56
        %v207 = vadd.s32 %v199, 64
        %v208 = vadd.s32 %v199, 72
        %v209 = vadd.s32 %v199, 80
        %v210 = vadd.s32 %v199, 88
        %v211 = vadd.s32 %v199, 96
        %v212 = vadd.s32 %v199, 104
        %v213 = vadd.s32 %v199, 112
        %v214 = vadd.s32 %v199, 120
        %v215 = vadd.s32 %v199, 128
        %v216 = vadd.s32 %v199, 136
        %v217 = vadd.s32 %v199, 144
        %v218 = vadd.s32 %v199, 152
        %v219 = vadd.s32 %v199, 160
        %v220 = vadd.s32 %v199, 168
        %v221 = vadd.s32 %v199, 176
        %v222 = vadd.s32 %v199, 184
        %v223 = vadd.s32 %v199, 192
        %v224 = vadd.s32 %v199, 200
        %v225 = vadd.s32 %v199, 208
        %v226 = vadd.s32 %v199, 216
        %v227 = vadd.s32 %v199, 224
        %v228 = vadd.s32 %v199, 232
        %v229 = vadd.s32 %v199, 240
        %v230 = vadd.s32 %v199, 248
        %v231 = vperm.slane %v197, 0
        %v232 = vsub.s32 %v199, %v231
        %v233 = vsub.s32 %v200, %v231
        %v234 = vsub.s32 %v201, %v231
        %v235 = vsub.s32 %v202, %v231
        %v236 = vsub.s32 %v203, %v231
        %v237 = vsub.s32 %v204, %v231
        %v238 = vsub.s32 %v205, %v231
        %v239 = vsub.s32 %v206, %v231
        %v240 = vsub.s32 %v207, %v231
        %v241 = vsub.s32 %v208, %v231
        %v242 = vsub.s32 %v209, %v231
        %v243 = vsub.s32 %v210, %v231
        %v244 = vsub.s32 %v211, %v231
        %v245 = vsub.s32 %v212, %v231
        %v246 = vsub.s32 %v213, %v231
        %v247 = vsub.s32 %v214, %v231
        %v248 = vsub.s32 %v215, %v231
        %v249 = vsub.s32 %v216, %v231
        %v250 = vsub.s32 %v217, %v231
        %v251 = vsub.s32 %v218, %v231
        %v252 = vsub.s32 %v219, %v231
        %v253 = vsub.s32 %v220, %v231
        %v254 = vsub.s32 %v221, %v231
        %v255 = vsub.s32 %v222, %v231
        %v256 = vsub.s32 %v223, %v231
        %v257 = vsub.s32 %v224, %v231
        %v258 = vsub.s32 %v225, %v231
        %v259 = vsub.s32 %v226, %v231
        %v260 = vsub.s32 %v227, %v231
        %v261 = vsub.s32 %v228, %v231
        %v262 = vsub.s32 %v229, %v231
        %v263 = vsub.s32 %v230, %v231
        %vm264 = vcmp.eq.s32.totalorder %v232, 0
        %vm265 = vcmp.eq.s32.totalorder %v233, 0
        %vm266 = vcmp.eq.s32.totalorder %v234, 0
        %vm267 = vcmp.eq.s32.totalorder %v235, 0
        %vm268 = vcmp.eq.s32.totalorder %v236, 0
        %vm269 = vcmp.eq.s32.totalorder %v237, 0
        %vm270 = vcmp.eq.s32.totalorder %v238, 0
        %vm271 = vcmp.eq.s32.totalorder %v239, 0
        %vm272 = vcmp.eq.s32.totalorder %v240, 0
        %vm273 = vcmp.eq.s32.totalorder %v241, 0
        %vm274 = vcmp.eq.s32.totalorder %v242, 0
        %vm275 = vcmp.eq.s32.totalorder %v243, 0
        %vm276 = vcmp.eq.s32.totalorder %v244, 0
        %vm277 = vcmp.eq.s32.totalorder %v245, 0
        %vm278 = vcmp.eq.s32.totalorder %v246, 0
        %vm279 = vcmp.eq.s32.totalorder %v247, 0
        %vm280 = vcmp.eq.s32.totalorder %v248, 0
        %vm281 = vcmp.eq.s32.totalorder %v249, 0
        %vm282 = vcmp.eq.s32.totalorder %v250, 0
        %vm283 = vcmp.eq.s32.totalorder %v251, 0
        %vm284 = vcmp.eq.s32.totalorder %v252, 0
        %vm285 = vcmp.eq.s32.totalorder %v253, 0
        %vm286 = vcmp.eq.s32.totalorder %v254, 0
        %vm287 = vcmp.eq.s32.totalorder %v255, 0
        %vm288 = vcmp.eq.s32.totalorder %v256, 0
        %vm289 = vcmp.eq.s32.totalorder %v257, 0
        %vm290 = vcmp.eq.s32.totalorder %v258, 0
        %vm291 = vcmp.eq.s32.totalorder %v259, 0
        %vm292 = vcmp.eq.s32.totalorder %v260, 0
        %vm293 = vcmp.eq.s32.totalorder %v261, 0
        %vm294 = vcmp.eq.s32.totalorder %v262, 0
        %vm295 = vcmp.eq.s32.totalorder %v263, 0
        %vm296 = vcmp.eq.s32.totalorder %v232, 16
        %vm297 = vcmp.eq.s32.totalorder %v233, 16
        %vm298 = vcmp.eq.s32.totalorder %v234, 16
        %vm299 = vcmp.eq.s32.totalorder %v235, 16
        %vm300 = vcmp.eq.s32.totalorder %v236, 16
        %vm301 = vcmp.eq.s32.totalorder %v237, 16
        %vm302 = vcmp.eq.s32.totalorder %v238, 16
        %vm303 = vcmp.eq.s32.totalorder %v239, 16
        %vm304 = vcmp.eq.s32.totalorder %v240, 16
        %vm305 = vcmp.eq.s32.totalorder %v241, 16
        %vm306 = vcmp.eq.s32.totalorder %v242, 16
        %vm307 = vcmp.eq.s32.totalorder %v243, 16
        %vm308 = vcmp.eq.s32.totalorder %v244, 16
        %vm309 = vcmp.eq.s32.totalorder %v245, 16
        %vm310 = vcmp.eq.s32.totalorder %v246, 16
        %vm311 = vcmp.eq.s32.totalorder %v247, 16
        %vm312 = vcmp.eq.s32.totalorder %v248, 16
        %vm313 = vcmp.eq.s32.totalorder %v249, 16
        %vm314 = vcmp.eq.s32.totalorder %v250, 16
        %vm315 = vcmp.eq.s32.totalorder %v251, 16
        %vm316 = vcmp.eq.s32.totalorder %v252, 16
        %vm317 = vcmp.eq.s32.totalorder %v253, 16
        %vm318 = vcmp.eq.s32.totalorder %v254, 16
        %vm319 = vcmp.eq.s32.totalorder %v255, 16
        %vm320 = vcmp.eq.s32.totalorder %v256, 16
        %vm321 = vcmp.eq.s32.totalorder %v257, 16
        %vm322 = vcmp.eq.s32.totalorder %v258, 16
        %vm323 = vcmp.eq.s32.totalorder %v259, 16
        %vm324 = vcmp.eq.s32.totalorder %v260, 16
        %vm325 = vcmp.eq.s32.totalorder %v261, 16
        %vm326 = vcmp.eq.s32.totalorder %v262, 16
        %vm327 = vcmp.eq.s32.totalorder %v263, 16
        %vm328 = vcmp.eq.s32.totalorder %v232, 1
        %vm329 = vcmp.eq.s32.totalorder %v233, 1
        %vm330 = vcmp.eq.s32.totalorder %v234, 1
        %vm331 = vcmp.eq.s32.totalorder %v235, 1
        %vm332 = vcmp.eq.s32.totalorder %v236, 1
        %vm333 = vcmp.eq.s32.totalorder %v237, 1
        %vm334 = vcmp.eq.s32.totalorder %v238, 1
        %vm335 = vcmp.eq.s32.totalorder %v239, 1
        %vm336 = vcmp.eq.s32.totalorder %v240, 1
        %vm337 = vcmp.eq.s32.totalorder %v241, 1
        %vm338 = vcmp.eq.s32.totalorder %v242, 1
        %vm339 = vcmp.eq.s32.totalorder %v243, 1
        %vm340 = vcmp.eq.s32.totalorder %v244, 1
        %vm341 = vcmp.eq.s32.totalorder %v245, 1
        %vm342 = vcmp.eq.s32.totalorder %v246, 1
        %vm343 = vcmp.eq.s32.totalorder %v247, 1
        %vm344 = vcmp.eq.s32.totalorder %v248, 1
        %vm345 = vcmp.eq.s32.totalorder %v249, 1
        %vm346 = vcmp.eq.s32.totalorder %v250, 1
        %vm347 = vcmp.eq.s32.totalorder %v251, 1
        %vm348 = vcmp.eq.s32.totalorder %v252, 1
        %vm349 = vcmp.eq.s32.totalorder %v253, 1
        %vm350 = vcmp.eq.s32.totalorder %v254, 1
        %vm351 = vcmp.eq.s32.totalorder %v255, 1
        %vm352 = vcmp.eq.s32.totalorder %v256, 1
        %vm353 = vcmp.eq.s32.totalorder %v257, 1
        %vm354 = vcmp.eq.s32.totalorder %v258, 1
        %vm355 = vcmp.eq.s32.totalorder %v259, 1
        %vm356 = vcmp.eq.s32.totalorder %v260, 1
        %vm357 = vcmp.eq.s32.totalorder %v261, 1
        %vm358 = vcmp.eq.s32.totalorder %v262, 1
        %vm359 = vcmp.eq.s32.totalorder %v263, 1
        %vm360 = vcmp.eq.s32.totalorder %v232, 17
        %vm361 = vcmp.eq.s32.totalorder %v233, 17
        %vm362 = vcmp.eq.s32.totalorder %v234, 17
        %vm363 = vcmp.eq.s32.totalorder %v235, 17
        %vm364 = vcmp.eq.s32.totalorder %v236, 17
        %vm365 = vcmp.eq.s32.totalorder %v237, 17
        %vm366 = vcmp.eq.s32.totalorder %v238, 17
        %vm367 = vcmp.eq.s32.totalorder %v239, 17
        %vm368 = vcmp.eq.s32.totalorder %v240, 17
        %vm369 = vcmp.eq.s32.totalorder %v241, 17
        %vm370 = vcmp.eq.s32.totalorder %v242, 17
        %vm371 = vcmp.eq.s32.totalorder %v243, 17
        %vm372 = vcmp.eq.s32.totalorder %v244, 17
        %vm373 = vcmp.eq.s32.totalorder %v245, 17
        %vm374 = vcmp.eq.s32.totalorder %v246, 17
        %vm375 = vcmp.eq.s32.totalorder %v247, 17
        %vm376 = vcmp.eq.s32.totalorder %v248, 17
        %vm377 = vcmp.eq.s32.totalorder %v249, 17
        %vm378 = vcmp.eq.s32.totalorder %v250, 17
        %vm379 = vcmp.eq.s32.totalorder %v251, 17
        %vm380 = vcmp.eq.s32.totalorder %v252, 17
        %vm381 = vcmp.eq.s32.totalorder %v253, 17
        %vm382 = vcmp.eq.s32.totalorder %v254, 17
        %vm383 = vcmp.eq.s32.totalorder %v255, 17
        %vm384 = vcmp.eq.s32.totalorder %v256, 17
        %vm385 = vcmp.eq.s32.totalorder %v257, 17
        %vm386 = vcmp.eq.s32.totalorder %v258, 17
        %vm387 = vcmp.eq.s32.totalorder %v259, 17
        %vm388 = vcmp.eq.s32.totalorder %v260, 17
        %vm389 = vcmp.eq.s32.totalorder %v261, 17
        %vm390 = vcmp.eq.s32.totalorder %v262, 17
        %vm391 = vcmp.eq.s32.totalorder %v263, 17
        %v392 = vperm.slane %v195, 0
        %v393 = vsel %vm360, %v392, 0.0
        %v394 = vsel %vm361, %v392, 0.0
        %v395 = vsel %vm362, %v392, 0.0
        %v396 = vsel %vm363, %v392, 0.0
        %v397 = vsel %vm364, %v392, 0.0
        %v398 = vsel %vm365, %v392, 0.0
        %v399 = vsel %vm366, %v392, 0.0
        %v400 = vsel %vm367, %v392, 0.0
        %v401 = vsel %vm368, %v392, 0.0
        %v402 = vsel %vm369, %v392, 0.0
        %v403 = vsel %vm370, %v392, 0.0
        %v404 = vsel %vm371, %v392, 0.0
        %v405 = vsel %vm372, %v392, 0.0
        %v406 = vsel %vm373, %v392, 0.0
        %v407 = vsel %vm374, %v392, 0.0
        %v408 = vsel %vm375, %v392, 0.0
        %v409 = vsel %vm376, %v392, 0.0
        %v410 = vsel %vm377, %v392, 0.0
        %v411 = vsel %vm378, %v392, 0.0
        %v412 = vsel %vm379, %v392, 0.0
        %v413 = vsel %vm380, %v392, 0.0
        %v414 = vsel %vm381, %v392, 0.0
        %v415 = vsel %vm382, %v392, 0.0
        %v416 = vsel %vm383, %v392, 0.0
        %v417 = vsel %vm384, %v392, 0.0
        %v418 = vsel %vm385, %v392, 0.0
        %v419 = vsel %vm386, %v392, 0.0
        %v420 = vsel %vm387, %v392, 0.0
        %v421 = vsel %vm388, %v392, 0.0
        %v422 = vsel %vm389, %v392, 0.0
        %v423 = vsel %vm390, %v392, 0.0
        %v424 = vsel %vm391, %v392, 0.0
        %v425 = vperm.slane %v189, 0
        %v426 = vsel %vm328, %v425, %v393
        %v427 = vsel %vm329, %v425, %v394
        %v428 = vsel %vm330, %v425, %v395
        %v429 = vsel %vm331, %v425, %v396
        %v430 = vsel %vm332, %v425, %v397
        %v431 = vsel %vm333, %v425, %v398
        %v432 = vsel %vm334, %v425, %v399
        %v433 = vsel %vm335, %v425, %v400
        %v434 = vsel %vm336, %v425, %v401
        %v435 = vsel %vm337, %v425, %v402
        %v436 = vsel %vm338, %v425, %v403
        %v437 = vsel %vm339, %v425, %v404
        %v438 = vsel %vm340, %v425, %v405
        %v439 = vsel %vm341, %v425, %v406
        %v440 = vsel %vm342, %v425, %v407
        %v441 = vsel %vm343, %v425, %v408
        %v442 = vsel %vm344, %v425, %v409
        %v443 = vsel %vm345, %v425, %v410
        %v444 = vsel %vm346, %v425, %v411
        %v445 = vsel %vm347, %v425, %v412
        %v446 = vsel %vm348, %v425, %v413
        %v447 = vsel %vm349, %v425, %v414
        %v448 = vsel %vm350, %v425, %v415
        %v449 = vsel %vm351, %v425, %v416
        %v450 = vsel %vm352, %v425, %v417
        %v451 = vsel %vm353, %v425, %v418
        %v452 = vsel %vm354, %v425, %v419
        %v453 = vsel %vm355, %v425, %v420
        %v454 = vsel %vm356, %v425, %v421
        %v455 = vsel %vm357, %v425, %v422
        %v456 = vsel %vm358, %v425, %v423
        %v457 = vsel %vm359, %v425, %v424
        %v458 = vperm.slane %v192, 0
        %v459 = vsel %vm296, %v458, %v426
        %v460 = vsel %vm297, %v458, %v427
        %v461 = vsel %vm298, %v458, %v428
        %v462 = vsel %vm299, %v458, %v429
        %v463 = vsel %vm300, %v458, %v430
        %v464 = vsel %vm301, %v458, %v431
        %v465 = vsel %vm302, %v458, %v432
        %v466 = vsel %vm303, %v458, %v433
        %v467 = vsel %vm304, %v458, %v434
        %v468 = vsel %vm305, %v458, %v435
        %v469 = vsel %vm306, %v458, %v436
        %v470 = vsel %vm307, %v458, %v437
        %v471 = vsel %vm308, %v458, %v438
        %v472 = vsel %vm309, %v458, %v439
        %v473 = vsel %vm310, %v458, %v440
        %v474 = vsel %vm311, %v458, %v441
        %v475 = vsel %vm312, %v458, %v442
        %v476 = vsel %vm313, %v458, %v443
        %v477 = vsel %vm314, %v458, %v444
        %v478 = vsel %vm315, %v458, %v445
        %v479 = vsel %vm316, %v458, %v446
        %v480 = vsel %vm317, %v458, %v447
        %v481 = vsel %vm318, %v458, %v448
        %v482 = vsel %vm319, %v458, %v449
        %v483 = vsel %vm320, %v458, %v450
        %v484 = vsel %vm321, %v458, %v451
        %v485 = vsel %vm322, %v458, %v452
        %v486 = vsel %vm323, %v458, %v453
        %v487 = vsel %vm324, %v458, %v454
        %v488 = vsel %vm325, %v458, %v455
        %v489 = vsel %vm326, %v458, %v456
        %v490 = vsel %vm327, %v458, %v457
        %v491 = vperm.slane %v186, 0
        %v492 = vsel %vm264, %v491, %v459
        %v493 = vsel %vm265, %v491, %v460
        %v494 = vsel %vm266, %v491, %v461
        %v495 = vsel %vm267, %v491, %v462
        %v496 = vsel %vm268, %v491, %v463
        %v497 = vsel %vm269, %v491, %v464
        %v498 = vsel %vm270, %v491, %v465
        %v499 = vsel %vm271, %v491, %v466
        %v500 = vsel %vm272, %v491, %v467
        %v501 = vsel %vm273, %v491, %v468
        %v502 = vsel %vm274, %v491, %v469
        %v503 = vsel %vm275, %v491, %v470
        %v504 = vsel %vm276, %v491, %v471
        %v505 = vsel %vm277, %v491, %v472
        %v506 = vsel %vm278, %v491, %v473
        %v507 = vsel %vm279, %v491, %v474
        %v508 = vsel %vm280, %v491, %v475
        %v509 = vsel %vm281, %v491, %v476
        %v510 = vsel %vm282, %v491, %v477
        %v511 = vsel %vm283, %v491, %v478
        %v512 = vsel %vm284, %v491, %v479
        %v513 = vsel %vm285, %v491, %v480
        %v514 = vsel %vm286, %v491, %v481
        %v515 = vsel %vm287, %v491, %v482
        %v516 = vsel %vm288, %v491, %v483
        %v517 = vsel %vm289, %v491, %v484
        %v518 = vsel %vm290, %v491, %v485
        %v519 = vsel %vm291, %v491, %v486
        %v520 = vsel %vm292, %v491, %v487
        %v521 = vsel %vm293, %v491, %v488
        %v522 = vsel %vm294, %v491, %v489
        %v523 = vsel %vm295, %v491, %v490
        %524 = vst [vmem:[#allocation1] ss:$4 sm:$0xff] %v152
        %v525 = vld.sshfl [vmem:[#allocation1] sm:$0xff pattern:$0x73625140]
        %v526 = vld.sshfl [vmem:[#allocation1 + $0x8] sm:$0xff pattern:$0x73625140]
        %529 = vmatpush.msra.mxu0 %v507
        %530 = vmatpush.msra.mxu0 %v506
        %531 = vmatpush.msra.mxu0 %v505
        %532 = vmatpush.msra.mxu0 %v504
        %533 = vmatpush.msra.mxu0 %v503
        %534 = vmatpush.msra.mxu0 %v502
        %535 = vmatpush.msra.mxu0 %v501
        %536 = vmatpush.msra.mxu0 %v500
        %537 = vmatpush.msra.mxu0 %v499
        %538 = vmatpush.msra.mxu0 %v498
        %539 = vmatpush.msra.mxu0 %v497
        %540 = vmatpush.msra.mxu0 %v496
        %541 = vmatpush.msra.mxu0 %v495
        %542 = vmatpush.msra.mxu0 %v494
        %543 = vmatpush.msra.mxu0 %v493
        %544 = vmatpush.msra.mxu0 %v492
        %545 = vmatmul.f32.gmra.mxu0 %v525
        %v546 = vpop.f32.mrf.mxu0
        %v547 = vadd.f32 0.0, %v546
        %548 = vdwg.mxu0
        %549 = vmatpush.msra.mxu0 %v523
        %550 = vmatpush.msra.mxu0 %v522
        %551 = vmatpush.msra.mxu0 %v521
        %552 = vmatpush.msra.mxu0 %v520
        %553 = vmatpush.msra.mxu0 %v519
        %554 = vmatpush.msra.mxu0 %v518
        %555 = vmatpush.msra.mxu0 %v517
        %556 = vmatpush.msra.mxu0 %v516
        %557 = vmatpush.msra.mxu0 %v515
        %558 = vmatpush.msra.mxu0 %v514
        %559 = vmatpush.msra.mxu0 %v513
        %560 = vmatpush.msra.mxu0 %v512
        %561 = vmatpush.msra.mxu0 %v511
        %562 = vmatpush.msra.mxu0 %v510
        %563 = vmatpush.msra.mxu0 %v509
        %564 = vmatpush.msra.mxu0 %v508
        %565 = vmatmul.f32.gmra.mxu0 %v526
        %v566 = vpop.f32.mrf.mxu0
        %v567 = vadd.f32 %v547, %v566
        %568 = vdwg.mxu0
        %v569 = vadd.f32 %v152, %v567
        %570 = vst [vmem:[#allocation3] sm:$0x3] %v569
        %571 = vst [vmem:[%s128] sm:$0x3] %v569
        %v572 = vadd.s32 %v154, 128
        %v573 = vshra.s32 %v572, 4
        %v574 = vand.u32 %v572, 15
        %v575 = vcvt.s32.f32 %v573
        %v576 = vperm.slane %v152, 2
        %v578 = vadd.f32 %v575, %v576
        %v579 = vcvt.s32.f32 %v574
        %v580 = vperm.slane %v152, 3
        %v582 = vadd.f32 %v579, %v580
        %v583 = vfloor.f32 %v578
        %v584 = vfloor.f32 %v582
        %v585 = vsub.f32 %v578, %v583
        %v586 = vsub.f32 %v582, %v584
        %v587 = vcvt.f32.s32.to.zero.pseudo %v583
        %v588 = vcvt.f32.s32.to.zero.pseudo %v584
        %vm589 = vcmp.ge.s32.totalorder %v587, 0
        %vm590 = vcmp.lt.s32.totalorder %v587, 16
        %vm591 = vmand %vm589, %vm590
        %vm592 = vcmp.ge.s32.totalorder %v587, 4294967295
        %vm593 = vcmp.lt.s32.totalorder %v587, 15
        %vm594 = vmand %vm592, %vm593
        %vm595 = vcmp.ge.s32.totalorder %v588, 0
        %vm596 = vcmp.lt.s32.totalorder %v588, 16
        %vm597 = vmand %vm595, %vm596
        %vm598 = vcmp.ge.s32.totalorder %v588, 4294967295
        %vm599 = vcmp.lt.s32.totalorder %v588, 15
        %vm600 = vmand %vm598, %vm599
        %vm601 = vmand %vm591, %vm597
        %v602 = vsub.f32 1.0, %v585
        %v603 = vsub.f32 1.0, %v586
        %v604 = vmul.f32 %v602, %v603
        %v605 = vsel %vm601, %v604, 0.0
        %vm606 = vmand %vm591, %vm600
        %v607 = vmul.f32 %v602, %v586
        %v608 = vsel %vm606, %v607, 0.0
        %vm609 = vmand %vm594, %vm597
        %v610 = vmul.f32 %v585, %v603
        %v611 = vsel %vm609, %v610, 0.0
        %vm612 = vmand %vm594, %vm600
        %v613 = vmul.f32 %v585, %v586
        %v614 = vsel %vm612, %v613, 0.0
        %v615 = vmul.u32 %v587, 16
        %v616 = vadd.s32 %v615, %v588
        %v617 = vperm.slane %v616, 0
        %v618 = vsub.s32 %v199, %v617
        %v619 = vsub.s32 %v200, %v617
        %v620 = vsub.s32 %v201, %v617
        %v621 = vsub.s32 %v202, %v617
        %v622 = vsub.s32 %v203, %v617
        %v623 = vsub.s32 %v204, %v617
        %v624 = vsub.s32 %v205, %v617
        %v625 = vsub.s32 %v206, %v617
        %v626 = vsub.s32 %v207, %v617
        %v627 = vsub.s32 %v208, %v617
        %v628 = vsub.s32 %v209, %v617
        %v629 = vsub.s32 %v210, %v617
        %v630 = vsub.s32 %v211, %v617
        %v631 = vsub.s32 %v212, %v617
        %v632 = vsub.s32 %v213, %v617
        %v633 = vsub.s32 %v214, %v617
        %v634 = vsub.s32 %v215, %v617
        %v635 = vsub.s32 %v216, %v617
        %v636 = vsub.s32 %v217, %v617
        %v637 = vsub.s32 %v218, %v617
        %v638 = vsub.s32 %v219, %v617
        %v639 = vsub.s32 %v220, %v617
        %v640 = vsub.s32 %v221, %v617
        %v641 = vsub.s32 %v222, %v617
        %v642 = vsub.s32 %v223, %v617
        %v643 = vsub.s32 %v224, %v617
        %v644 = vsub.s32 %v225, %v617
        %v645 = vsub.s32 %v226, %v617
        %v646 = vsub.s32 %v227, %v617
        %v647 = vsub.s32 %v228, %v617
        %v648 = vsub.s32 %v229, %v617
        %v649 = vsub.s32 %v230, %v617
        %vm650 = vcmp.eq.s32.totalorder %v618, 0
        %vm651 = vcmp.eq.s32.totalorder %v619, 0
        %vm652 = vcmp.eq.s32.totalorder %v620, 0
        %vm653 = vcmp.eq.s32.totalorder %v621, 0
        %vm654 = vcmp.eq.s32.totalorder %v622, 0
        %vm655 = vcmp.eq.s32.totalorder %v623, 0
        %vm656 = vcmp.eq.s32.totalorder %v624, 0
        %vm657 = vcmp.eq.s32.totalorder %v625, 0
        %vm658 = vcmp.eq.s32.totalorder %v626, 0
        %vm659 = vcmp.eq.s32.totalorder %v627, 0
        %vm660 = vcmp.eq.s32.totalorder %v628, 0
        %vm661 = vcmp.eq.s32.totalorder %v629, 0
        %vm662 = vcmp.eq.s32.totalorder %v630, 0
        %vm663 = vcmp.eq.s32.totalorder %v631, 0
        %vm664 = vcmp.eq.s32.totalorder %v632, 0
        %vm665 = vcmp.eq.s32.totalorder %v633, 0
        %vm666 = vcmp.eq.s32.totalorder %v634, 0
        %vm667 = vcmp.eq.s32.totalorder %v635, 0
        %vm668 = vcmp.eq.s32.totalorder %v636, 0
        %vm669 = vcmp.eq.s32.totalorder %v637, 0
        %vm670 = vcmp.eq.s32.totalorder %v638, 0
        %vm671 = vcmp.eq.s32.totalorder %v639, 0
        %vm672 = vcmp.eq.s32.totalorder %v640, 0
        %vm673 = vcmp.eq.s32.totalorder %v641, 0
        %vm674 = vcmp.eq.s32.totalorder %v642, 0
        %vm675 = vcmp.eq.s32.totalorder %v643, 0
        %vm676 = vcmp.eq.s32.totalorder %v644, 0
        %vm677 = vcmp.eq.s32.totalorder %v645, 0
        %vm678 = vcmp.eq.s32.totalorder %v646, 0
        %vm679 = vcmp.eq.s32.totalorder %v647, 0
        %vm680 = vcmp.eq.s32.totalorder %v648, 0
        %vm681 = vcmp.eq.s32.totalorder %v649, 0
        %vm682 = vcmp.eq.s32.totalorder %v618, 16
        %vm683 = vcmp.eq.s32.totalorder %v619, 16
        %vm684 = vcmp.eq.s32.totalorder %v620, 16
        %vm685 = vcmp.eq.s32.totalorder %v621, 16
        %vm686 = vcmp.eq.s32.totalorder %v622, 16
        %vm687 = vcmp.eq.s32.totalorder %v623, 16
        %vm688 = vcmp.eq.s32.totalorder %v624, 16
        %vm689 = vcmp.eq.s32.totalorder %v625, 16
        %vm690 = vcmp.eq.s32.totalorder %v626, 16
        %vm691 = vcmp.eq.s32.totalorder %v627, 16
        %vm692 = vcmp.eq.s32.totalorder %v628, 16
        %vm693 = vcmp.eq.s32.totalorder %v629, 16
        %vm694 = vcmp.eq.s32.totalorder %v630, 16
        %vm695 = vcmp.eq.s32.totalorder %v631, 16
        %vm696 = vcmp.eq.s32.totalorder %v632, 16
        %vm697 = vcmp.eq.s32.totalorder %v633, 16
        %vm698 = vcmp.eq.s32.totalorder %v634, 16
        %vm699 = vcmp.eq.s32.totalorder %v635, 16
        %vm700 = vcmp.eq.s32.totalorder %v636, 16
        %vm701 = vcmp.eq.s32.totalorder %v637, 16
        %vm702 = vcmp.eq.s32.totalorder %v638, 16
        %vm703 = vcmp.eq.s32.totalorder %v639, 16
        %vm704 = vcmp.eq.s32.totalorder %v640, 16
        %vm705 = vcmp.eq.s32.totalorder %v641, 16
        %vm706 = vcmp.eq.s32.totalorder %v642, 16
        %vm707 = vcmp.eq.s32.totalorder %v643, 16
        %vm708 = vcmp.eq.s32.totalorder %v644, 16
        %vm709 = vcmp.eq.s32.totalorder %v645, 16
        %vm710 = vcmp.eq.s32.totalorder %v646, 16
        %vm711 = vcmp.eq.s32.totalorder %v647, 16
        %vm712 = vcmp.eq.s32.totalorder %v648, 16
        %vm713 = vcmp.eq.s32.totalorder %v649, 16
        %vm714 = vcmp.eq.s32.totalorder %v618, 1
        %vm715 = vcmp.eq.s32.totalorder %v619, 1
        %vm716 = vcmp.eq.s32.totalorder %v620, 1
        %vm717 = vcmp.eq.s32.totalorder %v621, 1
        %vm718 = vcmp.eq.s32.totalorder %v622, 1
        %vm719 = vcmp.eq.s32.totalorder %v623, 1
        %vm720 = vcmp.eq.s32.totalorder %v624, 1
        %vm721 = vcmp.eq.s32.totalorder %v625, 1
        %vm722 = vcmp.eq.s32.totalorder %v626, 1
        %vm723 = vcmp.eq.s32.totalorder %v627, 1
        %vm724 = vcmp.eq.s32.totalorder %v628, 1
        %vm725 = vcmp.eq.s32.totalorder %v629, 1
        %vm726 = vcmp.eq.s32.totalorder %v630, 1
        %vm727 = vcmp.eq.s32.totalorder %v631, 1
        %vm728 = vcmp.eq.s32.totalorder %v632, 1
        %vm729 = vcmp.eq.s32.totalorder %v633, 1
        %vm730 = vcmp.eq.s32.totalorder %v634, 1
        %vm731 = vcmp.eq.s32.totalorder %v635, 1
        %vm732 = vcmp.eq.s32.totalorder %v636, 1
        %vm733 = vcmp.eq.s32.totalorder %v637, 1
        %vm734 = vcmp.eq.s32.totalorder %v638, 1
        %vm735 = vcmp.eq.s32.totalorder %v639, 1
        %vm736 = vcmp.eq.s32.totalorder %v640, 1
        %vm737 = vcmp.eq.s32.totalorder %v641, 1
        %vm738 = vcmp.eq.s32.totalorder %v642, 1
        %vm739 = vcmp.eq.s32.totalorder %v643, 1
        %vm740 = vcmp.eq.s32.totalorder %v644, 1
        %vm741 = vcmp.eq.s32.totalorder %v645, 1
        %vm742 = vcmp.eq.s32.totalorder %v646, 1
        %vm743 = vcmp.eq.s32.totalorder %v647, 1
        %vm744 = vcmp.eq.s32.totalorder %v648, 1
        %vm745 = vcmp.eq.s32.totalorder %v649, 1
        %vm746 = vcmp.eq.s32.totalorder %v618, 17
        %vm747 = vcmp.eq.s32.totalorder %v619, 17
        %vm748 = vcmp.eq.s32.totalorder %v620, 17
        %vm749 = vcmp.eq.s32.totalorder %v621, 17
        %vm750 = vcmp.eq.s32.totalorder %v622, 17
        %vm751 = vcmp.eq.s32.totalorder %v623, 17
        %vm752 = vcmp.eq.s32.totalorder %v624, 17
        %vm753 = vcmp.eq.s32.totalorder %v625, 17
        %vm754 = vcmp.eq.s32.totalorder %v626, 17
        %vm755 = vcmp.eq.s32.totalorder %v627, 17
        %vm756 = vcmp.eq.s32.totalorder %v628, 17
        %vm757 = vcmp.eq.s32.totalorder %v629, 17
        %vm758 = vcmp.eq.s32.totalorder %v630, 17
        %vm759 = vcmp.eq.s32.totalorder %v631, 17
        %vm760 = vcmp.eq.s32.totalorder %v632, 17
        %vm761 = vcmp.eq.s32.totalorder %v633, 17
        %vm762 = vcmp.eq.s32.totalorder %v634, 17
        %vm763 = vcmp.eq.s32.totalorder %v635, 17
        %vm764 = vcmp.eq.s32.totalorder %v636, 17
        %vm765 = vcmp.eq.s32.totalorder %v637, 17
        %vm766 = vcmp.eq.s32.totalorder %v638, 17
        %vm767 = vcmp.eq.s32.totalorder %v639, 17
        %vm768 = vcmp.eq.s32.totalorder %v640, 17
        %vm769 = vcmp.eq.s32.totalorder %v641, 17
        %vm770 = vcmp.eq.s32.totalorder %v642, 17
        %vm771 = vcmp.eq.s32.totalorder %v643, 17
        %vm772 = vcmp.eq.s32.totalorder %v644, 17
        %vm773 = vcmp.eq.s32.totalorder %v645, 17
        %vm774 = vcmp.eq.s32.totalorder %v646, 17
        %vm775 = vcmp.eq.s32.totalorder %v647, 17
        %vm776 = vcmp.eq.s32.totalorder %v648, 17
        %vm777 = vcmp.eq.s32.totalorder %v649, 17
        %v778 = vperm.slane %v614, 0
        %v779 = vsel %vm746, %v778, 0.0
        %v780 = vsel %vm747, %v778, 0.0
        %v781 = vsel %vm748, %v778, 0.0
        %v782 = vsel %vm749, %v778, 0.0
        %v783 = vsel %vm750, %v778, 0.0
        %v784 = vsel %vm751, %v778, 0.0
        %v785 = vsel %vm752, %v778, 0.0
        %v786 = vsel %vm753, %v778, 0.0
        %v787 = vsel %vm754, %v778, 0.0
        %v788 = vsel %vm755, %v778, 0.0
        %v789 = vsel %vm756, %v778, 0.0
        %v790 = vsel %vm757, %v778, 0.0
        %v791 = vsel %vm758, %v778, 0.0
        %v792 = vsel %vm759, %v778, 0.0
        %v793 = vsel %vm760, %v778, 0.0
        %v794 = vsel %vm761, %v778, 0.0
        %v795 = vsel %vm762, %v778, 0.0
        %v796 = vsel %vm763, %v778, 0.0
        %v797 = vsel %vm764, %v778, 0.0
        %v798 = vsel %vm765, %v778, 0.0
        %v799 = vsel %vm766, %v778, 0.0
        %v800 = vsel %vm767, %v778, 0.0
        %v801 = vsel %vm768, %v778, 0.0
        %v802 = vsel %vm769, %v778, 0.0
        %v803 = vsel %vm770, %v778, 0.0
        %v804 = vsel %vm771, %v778, 0.0
        %v805 = vsel %vm772, %v778, 0.0
        %v806 = vsel %vm773, %v778, 0.0
        %v807 = vsel %vm774, %v778, 0.0
        %v808 = vsel %vm775, %v778, 0.0
        %v809 = vsel %vm776, %v778, 0.0
        %v810 = vsel %vm777, %v778, 0.0
        %v811 = vperm.slane %v608, 0
        %v812 = vsel %vm714, %v811, %v779
        %v813 = vsel %vm715, %v811, %v780
        %v814 = vsel %vm716, %v811, %v781
        %v815 = vsel %vm717, %v811, %v782
        %v816 = vsel %vm718, %v811, %v783
        %v817 = vsel %vm719, %v811, %v784
        %v818 = vsel %vm720, %v811, %v785
        %v819 = vsel %vm721, %v811, %v786
        %v820 = vsel %vm722, %v811, %v787
        %v821 = vsel %vm723, %v811, %v788
        %v822 = vsel %vm724, %v811, %v789
        %v823 = vsel %vm725, %v811, %v790
        %v824 = vsel %vm726, %v811, %v791
        %v825 = vsel %vm727, %v811, %v792
        %v826 = vsel %vm728, %v811, %v793
        %v827 = vsel %vm729, %v811, %v794
        %v828 = vsel %vm730, %v811, %v795
        %v829 = vsel %vm731, %v811, %v796
        %v830 = vsel %vm732, %v811, %v797
        %v831 = vsel %vm733, %v811, %v798
        %v832 = vsel %vm734, %v811, %v799
        %v833 = vsel %vm735, %v811, %v800
        %v834 = vsel %vm736, %v811, %v801
        %v835 = vsel %vm737, %v811, %v802
        %v836 = vsel %vm738, %v811, %v803
        %v837 = vsel %vm739, %v811, %v804
        %v838 = vsel %vm740, %v811, %v805
        %v839 = vsel %vm741, %v811, %v806
        %v840 = vsel %vm742, %v811, %v807
        %v841 = vsel %vm743, %v811, %v808
        %v842 = vsel %vm744, %v811, %v809
        %v843 = vsel %vm745, %v811, %v810
        %v844 = vperm.slane %v611, 0
        %v845 = vsel %vm682, %v844, %v812
        %v846 = vsel %vm683, %v844, %v813
        %v847 = vsel %vm684, %v844, %v814
        %v848 = vsel %vm685, %v844, %v815
        %v849 = vsel %vm686, %v844, %v816
        %v850 = vsel %vm687, %v844, %v817
        %v851 = vsel %vm688, %v844, %v818
        %v852 = vsel %vm689, %v844, %v819
        %v853 = vsel %vm690, %v844, %v820
        %v854 = vsel %vm691, %v844, %v821
        %v855 = vsel %vm692, %v844, %v822
        %v856 = vsel %vm693, %v844, %v823
        %v857 = vsel %vm694, %v844, %v824
        %v858 = vsel %vm695, %v844, %v825
        %v859 = vsel %vm696, %v844, %v826
        %v860 = vsel %vm697, %v844, %v827
        %v861 = vsel %vm698, %v844, %v828
        %v862 = vsel %vm699, %v844, %v829
        %v863 = vsel %vm700, %v844, %v830
        %v864 = vsel %vm701, %v844, %v831
        %v865 = vsel %vm702, %v844, %v832
        %v866 = vsel %vm703, %v844, %v833
        %v867 = vsel %vm704, %v844, %v834
        %v868 = vsel %vm705, %v844, %v835
        %v869 = vsel %vm706, %v844, %v836
        %v870 = vsel %vm707, %v844, %v837
        %v871 = vsel %vm708, %v844, %v838
        %v872 = vsel %vm709, %v844, %v839
        %v873 = vsel %vm710, %v844, %v840
        %v874 = vsel %vm711, %v844, %v841
        %v875 = vsel %vm712, %v844, %v842
        %v876 = vsel %vm713, %v844, %v843
        %v877 = vperm.slane %v605, 0
        %v878 = vsel %vm650, %v877, %v845
        %v879 = vsel %vm651, %v877, %v846
        %v880 = vsel %vm652, %v877, %v847
        %v881 = vsel %vm653, %v877, %v848
        %v882 = vsel %vm654, %v877, %v849
        %v883 = vsel %vm655, %v877, %v850
        %v884 = vsel %vm656, %v877, %v851
        %v885 = vsel %vm657, %v877, %v852
        %v886 = vsel %vm658, %v877, %v853
        %v887 = vsel %vm659, %v877, %v854
        %v888 = vsel %vm660, %v877, %v855
        %v889 = vsel %vm661, %v877, %v856
        %v890 = vsel %vm662, %v877, %v857
        %v891 = vsel %vm663, %v877, %v858
        %v892 = vsel %vm664, %v877, %v859
        %v893 = vsel %vm665, %v877, %v860
        %v894 = vsel %vm666, %v877, %v861
        %v895 = vsel %vm667, %v877, %v862
        %v896 = vsel %vm668, %v877, %v863
        %v897 = vsel %vm669, %v877, %v864
        %v898 = vsel %vm670, %v877, %v865
        %v899 = vsel %vm671, %v877, %v866
        %v900 = vsel %vm672, %v877, %v867
        %v901 = vsel %vm673, %v877, %v868
        %v902 = vsel %vm674, %v877, %v869
        %v903 = vsel %vm675, %v877, %v870
        %v904 = vsel %vm676, %v877, %v871
        %v905 = vsel %vm677, %v877, %v872
        %v906 = vsel %vm678, %v877, %v873
        %v907 = vsel %vm679, %v877, %v874
        %v908 = vsel %vm680, %v877, %v875
        %v909 = vsel %vm681, %v877, %v876
        %910 = vst [vmem:[#allocation1] ss:$4 sm:$0xff] %v152
        %v911 = vld.sshfl [vmem:[#allocation1] sm:$0xff pattern:$0x73625140]
        %v912 = vld.sshfl [vmem:[#allocation1 + $0x8] sm:$0xff pattern:$0x73625140]
        %915 = vmatpush.msra.mxu0 %v893
        %916 = vmatpush.msra.mxu0 %v892
        %917 = vmatpush.msra.mxu0 %v891
        %918 = vmatpush.msra.mxu0 %v890
        %919 = vmatpush.msra.mxu0 %v889
        %920 = vmatpush.msra.mxu0 %v888
        %921 = vmatpush.msra.mxu0 %v887
        %922 = vmatpush.msra.mxu0 %v886
        %923 = vmatpush.msra.mxu0 %v885
        %924 = vmatpush.msra.mxu0 %v884
        %925 = vmatpush.msra.mxu0 %v883
        %926 = vmatpush.msra.mxu0 %v882
        %927 = vmatpush.msra.mxu0 %v881
        %928 = vmatpush.msra.mxu0 %v880
        %929 = vmatpush.msra.mxu0 %v879
        %930 = vmatpush.msra.mxu0 %v878
        %931 = vmatmul.f32.gmra.mxu0 %v911
        %v932 = vpop.f32.mrf.mxu0
        %v933 = vadd.f32 0.0, %v932
        %934 = vdwg.mxu0
        %935 = vmatpush.msra.mxu0 %v909
        %936 = vmatpush.msra.mxu0 %v908
        %937 = vmatpush.msra.mxu0 %v907
        %938 = vmatpush.msra.mxu0 %v906
        %939 = vmatpush.msra.mxu0 %v905
        %940 = vmatpush.msra.mxu0 %v904
        %941 = vmatpush.msra.mxu0 %v903
        %942 = vmatpush.msra.mxu0 %v902
        %943 = vmatpush.msra.mxu0 %v901
        %944 = vmatpush.msra.mxu0 %v900
        %945 = vmatpush.msra.mxu0 %v899
        %946 = vmatpush.msra.mxu0 %v898
        %947 = vmatpush.msra.mxu0 %v897
        %948 = vmatpush.msra.mxu0 %v896
        %949 = vmatpush.msra.mxu0 %v895
        %950 = vmatpush.msra.mxu0 %v894
        %951 = vmatmul.f32.gmra.mxu0 %v912
        %v952 = vpop.f32.mrf.mxu0
        %v953 = vadd.f32 %v933, %v952
        %954 = vdwg.mxu0
        %v955 = vrot.slane %v152, 2
        %v957 = vadd.f32 %v955, %v953
        %958 = vst [vmem:[#allocation3 + $0x2] sm:$0x3] %v957
        %959 = vst [vmem:[%s128 + $0x2] sm:$0x3] %v957
      $region32: #{dvf2ddf.1} parent=23 // pred_fallthru
        _
      %p960 = scmp.eq.s32.totalorder %s147, 1
      // Predicated region
      $region33: #{dvf2ddf.1} parent=23 // pred_check
        %p961 = pneg %p960
      $region34: #{dvf2ddf.1} parent=23 // pred_check_branch
        %963 = sbr.rel (%p961) target = $region36
      $region35: #{dvf2ddf.1} parent=23 // pred_region
        %v964 = vld [vmem:[#allocation3] sm:$0xf]
        %v965 = vlaneseq
        %v966 = vand.u32 %v965, 127
        %v967 = vshra.s32 %v966, 4
        %v968 = vand.u32 %v966, 15
        %v969 = vcvt.s32.f32 %v967
        %v970 = vadd.f32 %v969, %v964
        %v971 = vcvt.s32.f32 %v968
        %v973 = vperm.slane %v964, 1
        %v975 = vadd.f32 %v971, %v973
        %v976 = vfloor.f32 %v970
        %v977 = vfloor.f32 %v975
        %v978 = vsub.f32 %v970, %v976
        %v979 = vsub.f32 %v975, %v977
        %v980 = vcvt.f32.s32.to.zero.pseudo %v976
        %v981 = vcvt.f32.s32.to.zero.pseudo %v977
        %vm982 = vcmp.ge.s32.totalorder %v980, 0
        %vm983 = vcmp.lt.s32.totalorder %v980, 16
        %vm984 = vmand %vm982, %vm983
        %vm985 = vcmp.ge.s32.totalorder %v980, 4294967295
        %vm986 = vcmp.lt.s32.totalorder %v980, 15
        %vm987 = vmand %vm985, %vm986
        %vm988 = vcmp.ge.s32.totalorder %v981, 0
        %vm989 = vcmp.lt.s32.totalorder %v981, 16
        %vm990 = vmand %vm988, %vm989
        %vm991 = vcmp.ge.s32.totalorder %v981, 4294967295
        %vm992 = vcmp.lt.s32.totalorder %v981, 15
        %vm993 = vmand %vm991, %vm992
        %vm994 = vmand %vm984, %vm990
        %v995 = vsub.f32 1.0, %v978
        %v996 = vsub.f32 1.0, %v979
        %v997 = vmul.f32 %v995, %v996
        %v998 = vsel %vm994, %v997, 0.0
        %vm999 = vmand %vm984, %vm993
        %v1000 = vmul.f32 %v995, %v979
        %v1001 = vsel %vm999, %v1000, 0.0
        %vm1002 = vmand %vm987, %vm990
        %v1003 = vmul.f32 %v978, %v996
        %v1004 = vsel %vm1002, %v1003, 0.0
        %vm1005 = vmand %vm987, %vm993
        %v1006 = vmul.f32 %v978, %v979
        %v1007 = vsel %vm1005, %v1006, 0.0
        %v1008 = vmul.u32 %v980, 16
        %v1009 = vadd.s32 %v1008, %v981
        %v1010 = vlaneseq
        %v1011 = vshrl.u32 %v1010, 7
        %v1012 = vadd.s32 %v1011, 8
        %v1013 = vadd.s32 %v1011, 16
        %v1014 = vadd.s32 %v1011, 24
        %v1015 = vadd.s32 %v1011, 32
        %v1016 = vadd.s32 %v1011, 40
        %v1017 = vadd.s32 %v1011, 48
        %v1018 = vadd.s32 %v1011, 56
        %v1019 = vadd.s32 %v1011, 64
        %v1020 = vadd.s32 %v1011, 72
        %v1021 = vadd.s32 %v1011, 80
        %v1022 = vadd.s32 %v1011, 88
        %v1023 = vadd.s32 %v1011, 96
        %v1024 = vadd.s32 %v1011, 104
        %v1025 = vadd.s32 %v1011, 112
        %v1026 = vadd.s32 %v1011, 120
        %v1027 = vadd.s32 %v1011, 128
        %v1028 = vadd.s32 %v1011, 136
        %v1029 = vadd.s32 %v1011, 144
        %v1030 = vadd.s32 %v1011, 152
        %v1031 = vadd.s32 %v1011, 160
        %v1032 = vadd.s32 %v1011, 168
        %v1033 = vadd.s32 %v1011, 176
        %v1034 = vadd.s32 %v1011, 184
        %v1035 = vadd.s32 %v1011, 192
        %v1036 = vadd.s32 %v1011, 200
        %v1037 = vadd.s32 %v1011, 208
        %v1038 = vadd.s32 %v1011, 216
        %v1039 = vadd.s32 %v1011, 224
        %v1040 = vadd.s32 %v1011, 232
        %v1041 = vadd.s32 %v1011, 240
        %v1042 = vadd.s32 %v1011, 248
        %v1043 = vperm.slane %v1009, 0
        %v1044 = vsub.s32 %v1011, %v1043
        %v1045 = vsub.s32 %v1012, %v1043
        %v1046 = vsub.s32 %v1013, %v1043
        %v1047 = vsub.s32 %v1014, %v1043
        %v1048 = vsub.s32 %v1015, %v1043
        %v1049 = vsub.s32 %v1016, %v1043
        %v1050 = vsub.s32 %v1017, %v1043
        %v1051 = vsub.s32 %v1018, %v1043
        %v1052 = vsub.s32 %v1019, %v1043
        %v1053 = vsub.s32 %v1020, %v1043
        %v1054 = vsub.s32 %v1021, %v1043
        %v1055 = vsub.s32 %v1022, %v1043
        %v1056 = vsub.s32 %v1023, %v1043
        %v1057 = vsub.s32 %v1024, %v1043
        %v1058 = vsub.s32 %v1025, %v1043
        %v1059 = vsub.s32 %v1026, %v1043
        %v1060 = vsub.s32 %v1027, %v1043
        %v1061 = vsub.s32 %v1028, %v1043
        %v1062 = vsub.s32 %v1029, %v1043
        %v1063 = vsub.s32 %v1030, %v1043
        %v1064 = vsub.s32 %v1031, %v1043
        %v1065 = vsub.s32 %v1032, %v1043
        %v1066 = vsub.s32 %v1033, %v1043
        %v1067 = vsub.s32 %v1034, %v1043
        %v1068 = vsub.s32 %v1035, %v1043
        %v1069 = vsub.s32 %v1036, %v1043
        %v1070 = vsub.s32 %v1037, %v1043
        %v1071 = vsub.s32 %v1038, %v1043
        %v1072 = vsub.s32 %v1039, %v1043
        %v1073 = vsub.s32 %v1040, %v1043
        %v1074 = vsub.s32 %v1041, %v1043
        %v1075 = vsub.s32 %v1042, %v1043
        %vm1076 = vcmp.eq.s32.totalorder %v1044, 0
        %vm1077 = vcmp.eq.s32.totalorder %v1045, 0
        %vm1078 = vcmp.eq.s32.totalorder %v1046, 0
        %vm1079 = vcmp.eq.s32.totalorder %v1047, 0
        %vm1080 = vcmp.eq.s32.totalorder %v1048, 0
        %vm1081 = vcmp.eq.s32.totalorder %v1049, 0
        %vm1082 = vcmp.eq.s32.totalorder %v1050, 0
        %vm1083 = vcmp.eq.s32.totalorder %v1051, 0
        %vm1084 = vcmp.eq.s32.totalorder %v1052, 0
        %vm1085 = vcmp.eq.s32.totalorder %v1053, 0
        %vm1086 = vcmp.eq.s32.totalorder %v1054, 0
        %vm1087 = vcmp.eq.s32.totalorder %v1055, 0
        %vm1088 = vcmp.eq.s32.totalorder %v1056, 0
        %vm1089 = vcmp.eq.s32.totalorder %v1057, 0
        %vm1090 = vcmp.eq.s32.totalorder %v1058, 0
        %vm1091 = vcmp.eq.s32.totalorder %v1059, 0
        %vm1092 = vcmp.eq.s32.totalorder %v1060, 0
        %vm1093 = vcmp.eq.s32.totalorder %v1061, 0
        %vm1094 = vcmp.eq.s32.totalorder %v1062, 0
        %vm1095 = vcmp.eq.s32.totalorder %v1063, 0
        %vm1096 = vcmp.eq.s32.totalorder %v1064, 0
        %vm1097 = vcmp.eq.s32.totalorder %v1065, 0
        %vm1098 = vcmp.eq.s32.totalorder %v1066, 0
        %vm1099 = vcmp.eq.s32.totalorder %v1067, 0
        %vm1100 = vcmp.eq.s32.totalorder %v1068, 0
        %vm1101 = vcmp.eq.s32.totalorder %v1069, 0
        %vm1102 = vcmp.eq.s32.totalorder %v1070, 0
        %vm1103 = vcmp.eq.s32.totalorder %v1071, 0
        %vm1104 = vcmp.eq.s32.totalorder %v1072, 0
        %vm1105 = vcmp.eq.s32.totalorder %v1073, 0
        %vm1106 = vcmp.eq.s32.totalorder %v1074, 0
        %vm1107 = vcmp.eq.s32.totalorder %v1075, 0
        %vm1108 = vcmp.eq.s32.totalorder %v1044, 16
        %vm1109 = vcmp.eq.s32.totalorder %v1045, 16
        %vm1110 = vcmp.eq.s32.totalorder %v1046, 16
        %vm1111 = vcmp.eq.s32.totalorder %v1047, 16
        %vm1112 = vcmp.eq.s32.totalorder %v1048, 16
        %vm1113 = vcmp.eq.s32.totalorder %v1049, 16
        %vm1114 = vcmp.eq.s32.totalorder %v1050, 16
        %vm1115 = vcmp.eq.s32.totalorder %v1051, 16
        %vm1116 = vcmp.eq.s32.totalorder %v1052, 16
        %vm1117 = vcmp.eq.s32.totalorder %v1053, 16
        %vm1118 = vcmp.eq.s32.totalorder %v1054, 16
        %vm1119 = vcmp.eq.s32.totalorder %v1055, 16
        %vm1120 = vcmp.eq.s32.totalorder %v1056, 16
        %vm1121 = vcmp.eq.s32.totalorder %v1057, 16
        %vm1122 = vcmp.eq.s32.totalorder %v1058, 16
        %vm1123 = vcmp.eq.s32.totalorder %v1059, 16
        %vm1124 = vcmp.eq.s32.totalorder %v1060, 16
        %vm1125 = vcmp.eq.s32.totalorder %v1061, 16
        %vm1126 = vcmp.eq.s32.totalorder %v1062, 16
        %vm1127 = vcmp.eq.s32.totalorder %v1063, 16
        %vm1128 = vcmp.eq.s32.totalorder %v1064, 16
        %vm1129 = vcmp.eq.s32.totalorder %v1065, 16
        %vm1130 = vcmp.eq.s32.totalorder %v1066, 16
        %vm1131 = vcmp.eq.s32.totalorder %v1067, 16
        %vm1132 = vcmp.eq.s32.totalorder %v1068, 16
        %vm1133 = vcmp.eq.s32.totalorder %v1069, 16
        %vm1134 = vcmp.eq.s32.totalorder %v1070, 16
        %vm1135 = vcmp.eq.s32.totalorder %v1071, 16
        %vm1136 = vcmp.eq.s32.totalorder %v1072, 16
        %vm1137 = vcmp.eq.s32.totalorder %v1073, 16
        %vm1138 = vcmp.eq.s32.totalorder %v1074, 16
        %vm1139 = vcmp.eq.s32.totalorder %v1075, 16
        %vm1140 = vcmp.eq.s32.totalorder %v1044, 1
        %vm1141 = vcmp.eq.s32.totalorder %v1045, 1
        %vm1142 = vcmp.eq.s32.totalorder %v1046, 1
        %vm1143 = vcmp.eq.s32.totalorder %v1047, 1
        %vm1144 = vcmp.eq.s32.totalorder %v1048, 1
        %vm1145 = vcmp.eq.s32.totalorder %v1049, 1
        %vm1146 = vcmp.eq.s32.totalorder %v1050, 1
        %vm1147 = vcmp.eq.s32.totalorder %v1051, 1
        %vm1148 = vcmp.eq.s32.totalorder %v1052, 1
        %vm1149 = vcmp.eq.s32.totalorder %v1053, 1
        %vm1150 = vcmp.eq.s32.totalorder %v1054, 1
        %vm1151 = vcmp.eq.s32.totalorder %v1055, 1
        %vm1152 = vcmp.eq.s32.totalorder %v1056, 1
        %vm1153 = vcmp.eq.s32.totalorder %v1057, 1
        %vm1154 = vcmp.eq.s32.totalorder %v1058, 1
        %vm1155 = vcmp.eq.s32.totalorder %v1059, 1
        %vm1156 = vcmp.eq.s32.totalorder %v1060, 1
        %vm1157 = vcmp.eq.s32.totalorder %v1061, 1
        %vm1158 = vcmp.eq.s32.totalorder %v1062, 1
        %vm1159 = vcmp.eq.s32.totalorder %v1063, 1
        %vm1160 = vcmp.eq.s32.totalorder %v1064, 1
        %vm1161 = vcmp.eq.s32.totalorder %v1065, 1
        %vm1162 = vcmp.eq.s32.totalorder %v1066, 1
        %vm1163 = vcmp.eq.s32.totalorder %v1067, 1
        %vm1164 = vcmp.eq.s32.totalorder %v1068, 1
        %vm1165 = vcmp.eq.s32.totalorder %v1069, 1
        %vm1166 = vcmp.eq.s32.totalorder %v1070, 1
        %vm1167 = vcmp.eq.s32.totalorder %v1071, 1
        %vm1168 = vcmp.eq.s32.totalorder %v1072, 1
        %vm1169 = vcmp.eq.s32.totalorder %v1073, 1
        %vm1170 = vcmp.eq.s32.totalorder %v1074, 1
        %vm1171 = vcmp.eq.s32.totalorder %v1075, 1
        %vm1172 = vcmp.eq.s32.totalorder %v1044, 17
        %vm1173 = vcmp.eq.s32.totalorder %v1045, 17
        %vm1174 = vcmp.eq.s32.totalorder %v1046, 17
        %vm1175 = vcmp.eq.s32.totalorder %v1047, 17
        %vm1176 = vcmp.eq.s32.totalorder %v1048, 17
        %vm1177 = vcmp.eq.s32.totalorder %v1049, 17
        %vm1178 = vcmp.eq.s32.totalorder %v1050, 17
        %vm1179 = vcmp.eq.s32.totalorder %v1051, 17
        %vm1180 = vcmp.eq.s32.totalorder %v1052, 17
        %vm1181 = vcmp.eq.s32.totalorder %v1053, 17
        %vm1182 = vcmp.eq.s32.totalorder %v1054, 17
        %vm1183 = vcmp.eq.s32.totalorder %v1055, 17
        %vm1184 = vcmp.eq.s32.totalorder %v1056, 17
        %vm1185 = vcmp.eq.s32.totalorder %v1057, 17
        %vm1186 = vcmp.eq.s32.totalorder %v1058, 17
        %vm1187 = vcmp.eq.s32.totalorder %v1059, 17
        %vm1188 = vcmp.eq.s32.totalorder %v1060, 17
        %vm1189 = vcmp.eq.s32.totalorder %v1061, 17
        %vm1190 = vcmp.eq.s32.totalorder %v1062, 17
        %vm1191 = vcmp.eq.s32.totalorder %v1063, 17
        %vm1192 = vcmp.eq.s32.totalorder %v1064, 17
        %vm1193 = vcmp.eq.s32.totalorder %v1065, 17
        %vm1194 = vcmp.eq.s32.totalorder %v1066, 17
        %vm1195 = vcmp.eq.s32.totalorder %v1067, 17
        %vm1196 = vcmp.eq.s32.totalorder %v1068, 17
        %vm1197 = vcmp.eq.s32.totalorder %v1069, 17
        %vm1198 = vcmp.eq.s32.totalorder %v1070, 17
        %vm1199 = vcmp.eq.s32.totalorder %v1071, 17
        %vm1200 = vcmp.eq.s32.totalorder %v1072, 17
        %vm1201 = vcmp.eq.s32.totalorder %v1073, 17
        %vm1202 = vcmp.eq.s32.totalorder %v1074, 17
        %vm1203 = vcmp.eq.s32.totalorder %v1075, 17
        %v1204 = vperm.slane %v1007, 0
        %v1205 = vsel %vm1172, %v1204, 0.0
        %v1206 = vsel %vm1173, %v1204, 0.0
        %v1207 = vsel %vm1174, %v1204, 0.0
        %v1208 = vsel %vm1175, %v1204, 0.0
        %v1209 = vsel %vm1176, %v1204, 0.0
        %v1210 = vsel %vm1177, %v1204, 0.0
        %v1211 = vsel %vm1178, %v1204, 0.0
        %v1212 = vsel %vm1179, %v1204, 0.0
        %v1213 = vsel %vm1180, %v1204, 0.0
        %v1214 = vsel %vm1181, %v1204, 0.0
        %v1215 = vsel %vm1182, %v1204, 0.0
        %v1216 = vsel %vm1183, %v1204, 0.0
        %v1217 = vsel %vm1184, %v1204, 0.0
        %v1218 = vsel %vm1185, %v1204, 0.0
        %v1219 = vsel %vm1186, %v1204, 0.0
        %v1220 = vsel %vm1187, %v1204, 0.0
        %v1221 = vsel %vm1188, %v1204, 0.0
        %v1222 = vsel %vm1189, %v1204, 0.0
        %v1223 = vsel %vm1190, %v1204, 0.0
        %v1224 = vsel %vm1191, %v1204, 0.0
        %v1225 = vsel %vm1192, %v1204, 0.0
        %v1226 = vsel %vm1193, %v1204, 0.0
        %v1227 = vsel %vm1194, %v1204, 0.0
        %v1228 = vsel %vm1195, %v1204, 0.0
        %v1229 = vsel %vm1196, %v1204, 0.0
        %v1230 = vsel %vm1197, %v1204, 0.0
        %v1231 = vsel %vm1198, %v1204, 0.0
        %v1232 = vsel %vm1199, %v1204, 0.0
        %v1233 = vsel %vm1200, %v1204, 0.0
        %v1234 = vsel %vm1201, %v1204, 0.0
        %v1235 = vsel %vm1202, %v1204, 0.0
        %v1236 = vsel %vm1203, %v1204, 0.0
        %v1237 = vperm.slane %v1001, 0
        %v1238 = vsel %vm1140, %v1237, %v1205
        %v1239 = vsel %vm1141, %v1237, %v1206
        %v1240 = vsel %vm1142, %v1237, %v1207
        %v1241 = vsel %vm1143, %v1237, %v1208
        %v1242 = vsel %vm1144, %v1237, %v1209
        %v1243 = vsel %vm1145, %v1237, %v1210
        %v1244 = vsel %vm1146, %v1237, %v1211
        %v1245 = vsel %vm1147, %v1237, %v1212
        %v1246 = vsel %vm1148, %v1237, %v1213
        %v1247 = vsel %vm1149, %v1237, %v1214
        %v1248 = vsel %vm1150, %v1237, %v1215
        %v1249 = vsel %vm1151, %v1237, %v1216
        %v1250 = vsel %vm1152, %v1237, %v1217
        %v1251 = vsel %vm1153, %v1237, %v1218
        %v1252 = vsel %vm1154, %v1237, %v1219
        %v1253 = vsel %vm1155, %v1237, %v1220
        %v1254 = vsel %vm1156, %v1237, %v1221
        %v1255 = vsel %vm1157, %v1237, %v1222
        %v1256 = vsel %vm1158, %v1237, %v1223
        %v1257 = vsel %vm1159, %v1237, %v1224
        %v1258 = vsel %vm1160, %v1237, %v1225
        %v1259 = vsel %vm1161, %v1237, %v1226
        %v1260 = vsel %vm1162, %v1237, %v1227
        %v1261 = vsel %vm1163, %v1237, %v1228
        %v1262 = vsel %vm1164, %v1237, %v1229
        %v1263 = vsel %vm1165, %v1237, %v1230
        %v1264 = vsel %vm1166, %v1237, %v1231
        %v1265 = vsel %vm1167, %v1237, %v1232
        %v1266 = vsel %vm1168, %v1237, %v1233
        %v1267 = vsel %vm1169, %v1237, %v1234
        %v1268 = vsel %vm1170, %v1237, %v1235
        %v1269 = vsel %vm1171, %v1237, %v1236
        %v1270 = vperm.slane %v1004, 0
        %v1271 = vsel %vm1108, %v1270, %v1238
        %v1272 = vsel %vm1109, %v1270, %v1239
        %v1273 = vsel %vm1110, %v1270, %v1240
        %v1274 = vsel %vm1111, %v1270, %v1241
        %v1275 = vsel %vm1112, %v1270, %v1242
        %v1276 = vsel %vm1113, %v1270, %v1243
        %v1277 = vsel %vm1114, %v1270, %v1244
        %v1278 = vsel %vm1115, %v1270, %v1245
        %v1279 = vsel %vm1116, %v1270, %v1246
        %v1280 = vsel %vm1117, %v1270, %v1247
        %v1281 = vsel %vm1118, %v1270, %v1248
        %v1282 = vsel %vm1119, %v1270, %v1249
        %v1283 = vsel %vm1120, %v1270, %v1250
        %v1284 = vsel %vm1121, %v1270, %v1251
        %v1285 = vsel %vm1122, %v1270, %v1252
        %v1286 = vsel %vm1123, %v1270, %v1253
        %v1287 = vsel %vm1124, %v1270, %v1254
        %v1288 = vsel %vm1125, %v1270, %v1255
        %v1289 = vsel %vm1126, %v1270, %v1256
        %v1290 = vsel %vm1127, %v1270, %v1257
        %v1291 = vsel %vm1128, %v1270, %v1258
        %v1292 = vsel %vm1129, %v1270, %v1259
        %v1293 = vsel %vm1130, %v1270, %v1260
        %v1294 = vsel %vm1131, %v1270, %v1261
        %v1295 = vsel %vm1132, %v1270, %v1262
        %v1296 = vsel %vm1133, %v1270, %v1263
        %v1297 = vsel %vm1134, %v1270, %v1264
        %v1298 = vsel %vm1135, %v1270, %v1265
        %v1299 = vsel %vm1136, %v1270, %v1266
        %v1300 = vsel %vm1137, %v1270, %v1267
        %v1301 = vsel %vm1138, %v1270, %v1268
        %v1302 = vsel %vm1139, %v1270, %v1269
        %v1303 = vperm.slane %v998, 0
        %v1304 = vsel %vm1076, %v1303, %v1271
        %v1305 = vsel %vm1077, %v1303, %v1272
        %v1306 = vsel %vm1078, %v1303, %v1273
        %v1307 = vsel %vm1079, %v1303, %v1274
        %v1308 = vsel %vm1080, %v1303, %v1275
        %v1309 = vsel %vm1081, %v1303, %v1276
        %v1310 = vsel %vm1082, %v1303, %v1277
        %v1311 = vsel %vm1083, %v1303, %v1278
        %v1312 = vsel %vm1084, %v1303, %v1279
        %v1313 = vsel %vm1085, %v1303, %v1280
        %v1314 = vsel %vm1086, %v1303, %v1281
        %v1315 = vsel %vm1087, %v1303, %v1282
        %v1316 = vsel %vm1088, %v1303, %v1283
        %v1317 = vsel %vm1089, %v1303, %v1284
        %v1318 = vsel %vm1090, %v1303, %v1285
        %v1319 = vsel %vm1091, %v1303, %v1286
        %v1320 = vsel %vm1092, %v1303, %v1287
        %v1321 = vsel %vm1093, %v1303, %v1288
        %v1322 = vsel %vm1094, %v1303, %v1289
        %v1323 = vsel %vm1095, %v1303, %v1290
        %v1324 = vsel %vm1096, %v1303, %v1291
        %v1325 = vsel %vm1097, %v1303, %v1292
        %v1326 = vsel %vm1098, %v1303, %v1293
        %v1327 = vsel %vm1099, %v1303, %v1294
        %v1328 = vsel %vm1100, %v1303, %v1295
        %v1329 = vsel %vm1101, %v1303, %v1296
        %v1330 = vsel %vm1102, %v1303, %v1297
        %v1331 = vsel %vm1103, %v1303, %v1298
        %v1332 = vsel %vm1104, %v1303, %v1299
        %v1333 = vsel %vm1105, %v1303, %v1300
        %v1334 = vsel %vm1106, %v1303, %v1301
        %v1335 = vsel %vm1107, %v1303, %v1302
        %1336 = vst [vmem:[#allocation1] ss:$4 sm:$0xff] %v964
        %v1337 = vld.sshfl [vmem:[#allocation1] sm:$0xff pattern:$0x73625140]
        %v1338 = vld.sshfl [vmem:[#allocation1 + $0x8] sm:$0xff pattern:$0x73625140]
        %1341 = vmatpush.msra.mxu0 %v1319
        %1342 = vmatpush.msra.mxu0 %v1318
        %1343 = vmatpush.msra.mxu0 %v1317
        %1344 = vmatpush.msra.mxu0 %v1316
        %1345 = vmatpush.msra.mxu0 %v1315
        %1346 = vmatpush.msra.mxu0 %v1314
        %1347 = vmatpush.msra.mxu0 %v1313
        %1348 = vmatpush.msra.mxu0 %v1312
        %1349 = vmatpush.msra.mxu0 %v1311
        %1350 = vmatpush.msra.mxu0 %v1310
        %1351 = vmatpush.msra.mxu0 %v1309
        %1352 = vmatpush.msra.mxu0 %v1308
        %1353 = vmatpush.msra.mxu0 %v1307
        %1354 = vmatpush.msra.mxu0 %v1306
        %1355 = vmatpush.msra.mxu0 %v1305
        %1356 = vmatpush.msra.mxu0 %v1304
        %1357 = vmatmul.f32.gmra.mxu0 %v1337
        %v1358 = vpop.f32.mrf.mxu0
        %v1359 = vadd.f32 0.0, %v1358
        %1360 = vdwg.mxu0
        %1361 = vmatpush.msra.mxu0 %v1335
        %1362 = vmatpush.msra.mxu0 %v1334
        %1363 = vmatpush.msra.mxu0 %v1333
        %1364 = vmatpush.msra.mxu0 %v1332
        %1365 = vmatpush.msra.mxu0 %v1331
        %1366 = vmatpush.msra.mxu0 %v1330
        %1367 = vmatpush.msra.mxu0 %v1329
        %1368 = vmatpush.msra.mxu0 %v1328
        %1369 = vmatpush.msra.mxu0 %v1327
        %1370 = vmatpush.msra.mxu0 %v1326
        %1371 = vmatpush.msra.mxu0 %v1325
        %1372 = vmatpush.msra.mxu0 %v1324
        %1373 = vmatpush.msra.mxu0 %v1323
        %1374 = vmatpush.msra.mxu0 %v1322
        %1375 = vmatpush.msra.mxu0 %v1321
        %1376 = vmatpush.msra.mxu0 %v1320
        %1377 = vmatmul.f32.gmra.mxu0 %v1338
        %v1378 = vpop.f32.mrf.mxu0
        %v1379 = vadd.f32 %v1359, %v1378
        %1380 = vdwg.mxu0
        %v1381 = vadd.f32 %v964, %v1379
        %1382 = vst [vmem:[#allocation2] sm:$0x3] %v1381
        %1383 = vst [vmem:[%s128] sm:$0x3] %v1381
        %v1384 = vadd.s32 %v966, 128
        %v1385 = vshra.s32 %v1384, 4
        %v1386 = vand.u32 %v1384, 15
        %v1387 = vcvt.s32.f32 %v1385
        %v1388 = vperm.slane %v964, 2
        %v1390 = vadd.f32 %v1387, %v1388
        %v1391 = vcvt.s32.f32 %v1386
        %v1392 = vperm.slane %v964, 3
        %v1394 = vadd.f32 %v1391, %v1392
        %v1395 = vfloor.f32 %v1390
        %v1396 = vfloor.f32 %v1394
        %v1397 = vsub.f32 %v1390, %v1395
        %v1398 = vsub.f32 %v1394, %v1396
        %v1399 = vcvt.f32.s32.to.zero.pseudo %v1395
        %v1400 = vcvt.f32.s32.to.zero.pseudo %v1396
        %vm1401 = vcmp.ge.s32.totalorder %v1399, 0
        %vm1402 = vcmp.lt.s32.totalorder %v1399, 16
        %vm1403 = vmand %vm1401, %vm1402
        %vm1404 = vcmp.ge.s32.totalorder %v1399, 4294967295
        %vm1405 = vcmp.lt.s32.totalorder %v1399, 15
        %vm1406 = vmand %vm1404, %vm1405
        %vm1407 = vcmp.ge.s32.totalorder %v1400, 0
        %vm1408 = vcmp.lt.s32.totalorder %v1400, 16
        %vm1409 = vmand %vm1407, %vm1408
        %vm1410 = vcmp.ge.s32.totalorder %v1400, 4294967295
        %vm1411 = vcmp.lt.s32.totalorder %v1400, 15
        %vm1412 = vmand %vm1410, %vm1411
        %vm1413 = vmand %vm1403, %vm1409
        %v1414 = vsub.f32 1.0, %v1397
        %v1415 = vsub.f32 1.0, %v1398
        %v1416 = vmul.f32 %v1414, %v1415
        %v1417 = vsel %vm1413, %v1416, 0.0
        %vm1418 = vmand %vm1403, %vm1412
        %v1419 = vmul.f32 %v1414, %v1398
        %v1420 = vsel %vm1418, %v1419, 0.0
        %vm1421 = vmand %vm1406, %vm1409
        %v1422 = vmul.f32 %v1397, %v1415
        %v1423 = vsel %vm1421, %v1422, 0.0
        %vm1424 = vmand %vm1406, %vm1412
        %v1425 = vmul.f32 %v1397, %v1398
        %v1426 = vsel %vm1424, %v1425, 0.0
        %v1427 = vmul.u32 %v1399, 16
        %v1428 = vadd.s32 %v1427, %v1400
        %v1429 = vperm.slane %v1428, 0
        %v1430 = vsub.s32 %v1011, %v1429
        %v1431 = vsub.s32 %v1012, %v1429
        %v1432 = vsub.s32 %v1013, %v1429
        %v1433 = vsub.s32 %v1014, %v1429
        %v1434 = vsub.s32 %v1015, %v1429
        %v1435 = vsub.s32 %v1016, %v1429
        %v1436 = vsub.s32 %v1017, %v1429
        %v1437 = vsub.s32 %v1018, %v1429
        %v1438 = vsub.s32 %v1019, %v1429
        %v1439 = vsub.s32 %v1020, %v1429
        %v1440 = vsub.s32 %v1021, %v1429
        %v1441 = vsub.s32 %v1022, %v1429
        %v1442 = vsub.s32 %v1023, %v1429
        %v1443 = vsub.s32 %v1024, %v1429
        %v1444 = vsub.s32 %v1025, %v1429
        %v1445 = vsub.s32 %v1026, %v1429
        %v1446 = vsub.s32 %v1027, %v1429
        %v1447 = vsub.s32 %v1028, %v1429
        %v1448 = vsub.s32 %v1029, %v1429
        %v1449 = vsub.s32 %v1030, %v1429
        %v1450 = vsub.s32 %v1031, %v1429
        %v1451 = vsub.s32 %v1032, %v1429
        %v1452 = vsub.s32 %v1033, %v1429
        %v1453 = vsub.s32 %v1034, %v1429
        %v1454 = vsub.s32 %v1035, %v1429
        %v1455 = vsub.s32 %v1036, %v1429
        %v1456 = vsub.s32 %v1037, %v1429
        %v1457 = vsub.s32 %v1038, %v1429
        %v1458 = vsub.s32 %v1039, %v1429
        %v1459 = vsub.s32 %v1040, %v1429
        %v1460 = vsub.s32 %v1041, %v1429
        %v1461 = vsub.s32 %v1042, %v1429
        %vm1462 = vcmp.eq.s32.totalorder %v1430, 0
        %vm1463 = vcmp.eq.s32.totalorder %v1431, 0
        %vm1464 = vcmp.eq.s32.totalorder %v1432, 0
        %vm1465 = vcmp.eq.s32.totalorder %v1433, 0
        %vm1466 = vcmp.eq.s32.totalorder %v1434, 0
        %vm1467 = vcmp.eq.s32.totalorder %v1435, 0
        %vm1468 = vcmp.eq.s32.totalorder %v1436, 0
        %vm1469 = vcmp.eq.s32.totalorder %v1437, 0
        %vm1470 = vcmp.eq.s32.totalorder %v1438, 0
        %vm1471 = vcmp.eq.s32.totalorder %v1439, 0
        %vm1472 = vcmp.eq.s32.totalorder %v1440, 0
        %vm1473 = vcmp.eq.s32.totalorder %v1441, 0
        %vm1474 = vcmp.eq.s32.totalorder %v1442, 0
        %vm1475 = vcmp.eq.s32.totalorder %v1443, 0
        %vm1476 = vcmp.eq.s32.totalorder %v1444, 0
        %vm1477 = vcmp.eq.s32.totalorder %v1445, 0
        %vm1478 = vcmp.eq.s32.totalorder %v1446, 0
        %vm1479 = vcmp.eq.s32.totalorder %v1447, 0
        %vm1480 = vcmp.eq.s32.totalorder %v1448, 0
        %vm1481 = vcmp.eq.s32.totalorder %v1449, 0
        %vm1482 = vcmp.eq.s32.totalorder %v1450, 0
        %vm1483 = vcmp.eq.s32.totalorder %v1451, 0
        %vm1484 = vcmp.eq.s32.totalorder %v1452, 0
        %vm1485 = vcmp.eq.s32.totalorder %v1453, 0
        %vm1486 = vcmp.eq.s32.totalorder %v1454, 0
        %vm1487 = vcmp.eq.s32.totalorder %v1455, 0
        %vm1488 = vcmp.eq.s32.totalorder %v1456, 0
        %vm1489 = vcmp.eq.s32.totalorder %v1457, 0
        %vm1490 = vcmp.eq.s32.totalorder %v1458, 0
        %vm1491 = vcmp.eq.s32.totalorder %v1459, 0
        %vm1492 = vcmp.eq.s32.totalorder %v1460, 0
        %vm1493 = vcmp.eq.s32.totalorder %v1461, 0
        %vm1494 = vcmp.eq.s32.totalorder %v1430, 16
        %vm1495 = vcmp.eq.s32.totalorder %v1431, 16
        %vm1496 = vcmp.eq.s32.totalorder %v1432, 16
        %vm1497 = vcmp.eq.s32.totalorder %v1433, 16
        %vm1498 = vcmp.eq.s32.totalorder %v1434, 16
        %vm1499 = vcmp.eq.s32.totalorder %v1435, 16
        %vm1500 = vcmp.eq.s32.totalorder %v1436, 16
        %vm1501 = vcmp.eq.s32.totalorder %v1437, 16
        %vm1502 = vcmp.eq.s32.totalorder %v1438, 16
        %vm1503 = vcmp.eq.s32.totalorder %v1439, 16
        %vm1504 = vcmp.eq.s32.totalorder %v1440, 16
        %vm1505 = vcmp.eq.s32.totalorder %v1441, 16
        %vm1506 = vcmp.eq.s32.totalorder %v1442, 16
        %vm1507 = vcmp.eq.s32.totalorder %v1443, 16
        %vm1508 = vcmp.eq.s32.totalorder %v1444, 16
        %vm1509 = vcmp.eq.s32.totalorder %v1445, 16
        %vm1510 = vcmp.eq.s32.totalorder %v1446, 16
        %vm1511 = vcmp.eq.s32.totalorder %v1447, 16
        %vm1512 = vcmp.eq.s32.totalorder %v1448, 16
        %vm1513 = vcmp.eq.s32.totalorder %v1449, 16
        %vm1514 = vcmp.eq.s32.totalorder %v1450, 16
        %vm1515 = vcmp.eq.s32.totalorder %v1451, 16
        %vm1516 = vcmp.eq.s32.totalorder %v1452, 16
        %vm1517 = vcmp.eq.s32.totalorder %v1453, 16
        %vm1518 = vcmp.eq.s32.totalorder %v1454, 16
        %vm1519 = vcmp.eq.s32.totalorder %v1455, 16
        %vm1520 = vcmp.eq.s32.totalorder %v1456, 16
        %vm1521 = vcmp.eq.s32.totalorder %v1457, 16
        %vm1522 = vcmp.eq.s32.totalorder %v1458, 16
        %vm1523 = vcmp.eq.s32.totalorder %v1459, 16
        %vm1524 = vcmp.eq.s32.totalorder %v1460, 16
        %vm1525 = vcmp.eq.s32.totalorder %v1461, 16
        %vm1526 = vcmp.eq.s32.totalorder %v1430, 1
        %vm1527 = vcmp.eq.s32.totalorder %v1431, 1
        %vm1528 = vcmp.eq.s32.totalorder %v1432, 1
        %vm1529 = vcmp.eq.s32.totalorder %v1433, 1
        %vm1530 = vcmp.eq.s32.totalorder %v1434, 1
        %vm1531 = vcmp.eq.s32.totalorder %v1435, 1
        %vm1532 = vcmp.eq.s32.totalorder %v1436, 1
        %vm1533 = vcmp.eq.s32.totalorder %v1437, 1
        %vm1534 = vcmp.eq.s32.totalorder %v1438, 1
        %vm1535 = vcmp.eq.s32.totalorder %v1439, 1
        %vm1536 = vcmp.eq.s32.totalorder %v1440, 1
        %vm1537 = vcmp.eq.s32.totalorder %v1441, 1
        %vm1538 = vcmp.eq.s32.totalorder %v1442, 1
        %vm1539 = vcmp.eq.s32.totalorder %v1443, 1
        %vm1540 = vcmp.eq.s32.totalorder %v1444, 1
        %vm1541 = vcmp.eq.s32.totalorder %v1445, 1
        %vm1542 = vcmp.eq.s32.totalorder %v1446, 1
        %vm1543 = vcmp.eq.s32.totalorder %v1447, 1
        %vm1544 = vcmp.eq.s32.totalorder %v1448, 1
        %vm1545 = vcmp.eq.s32.totalorder %v1449, 1
        %vm1546 = vcmp.eq.s32.totalorder %v1450, 1
        %vm1547 = vcmp.eq.s32.totalorder %v1451, 1
        %vm1548 = vcmp.eq.s32.totalorder %v1452, 1
        %vm1549 = vcmp.eq.s32.totalorder %v1453, 1
        %vm1550 = vcmp.eq.s32.totalorder %v1454, 1
        %vm1551 = vcmp.eq.s32.totalorder %v1455, 1
        %vm1552 = vcmp.eq.s32.totalorder %v1456, 1
        %vm1553 = vcmp.eq.s32.totalorder %v1457, 1
        %vm1554 = vcmp.eq.s32.totalorder %v1458, 1
        %vm1555 = vcmp.eq.s32.totalorder %v1459, 1
        %vm1556 = vcmp.eq.s32.totalorder %v1460, 1
        %vm1557 = vcmp.eq.s32.totalorder %v1461, 1
        %vm1558 = vcmp.eq.s32.totalorder %v1430, 17
        %vm1559 = vcmp.eq.s32.totalorder %v1431, 17
        %vm1560 = vcmp.eq.s32.totalorder %v1432, 17
        %vm1561 = vcmp.eq.s32.totalorder %v1433, 17
        %vm1562 = vcmp.eq.s32.totalorder %v1434, 17
        %vm1563 = vcmp.eq.s32.totalorder %v1435, 17
        %vm1564 = vcmp.eq.s32.totalorder %v1436, 17
        %vm1565 = vcmp.eq.s32.totalorder %v1437, 17
        %vm1566 = vcmp.eq.s32.totalorder %v1438, 17
        %vm1567 = vcmp.eq.s32.totalorder %v1439, 17
        %vm1568 = vcmp.eq.s32.totalorder %v1440, 17
        %vm1569 = vcmp.eq.s32.totalorder %v1441, 17
        %vm1570 = vcmp.eq.s32.totalorder %v1442, 17
        %vm1571 = vcmp.eq.s32.totalorder %v1443, 17
        %vm1572 = vcmp.eq.s32.totalorder %v1444, 17
        %vm1573 = vcmp.eq.s32.totalorder %v1445, 17
        %vm1574 = vcmp.eq.s32.totalorder %v1446, 17
        %vm1575 = vcmp.eq.s32.totalorder %v1447, 17
        %vm1576 = vcmp.eq.s32.totalorder %v1448, 17
        %vm1577 = vcmp.eq.s32.totalorder %v1449, 17
        %vm1578 = vcmp.eq.s32.totalorder %v1450, 17
        %vm1579 = vcmp.eq.s32.totalorder %v1451, 17
        %vm1580 = vcmp.eq.s32.totalorder %v1452, 17
        %vm1581 = vcmp.eq.s32.totalorder %v1453, 17
        %vm1582 = vcmp.eq.s32.totalorder %v1454, 17
        %vm1583 = vcmp.eq.s32.totalorder %v1455, 17
        %vm1584 = vcmp.eq.s32.totalorder %v1456, 17
        %vm1585 = vcmp.eq.s32.totalorder %v1457, 17
        %vm1586 = vcmp.eq.s32.totalorder %v1458, 17
        %vm1587 = vcmp.eq.s32.totalorder %v1459, 17
        %vm1588 = vcmp.eq.s32.totalorder %v1460, 17
        %vm1589 = vcmp.eq.s32.totalorder %v1461, 17
        %v1590 = vperm.slane %v1426, 0
        %v1591 = vsel %vm1558, %v1590, 0.0
        %v1592 = vsel %vm1559, %v1590, 0.0
        %v1593 = vsel %vm1560, %v1590, 0.0
        %v1594 = vsel %vm1561, %v1590, 0.0
        %v1595 = vsel %vm1562, %v1590, 0.0
        %v1596 = vsel %vm1563, %v1590, 0.0
        %v1597 = vsel %vm1564, %v1590, 0.0
        %v1598 = vsel %vm1565, %v1590, 0.0
        %v1599 = vsel %vm1566, %v1590, 0.0
        %v1600 = vsel %vm1567, %v1590, 0.0
        %v1601 = vsel %vm1568, %v1590, 0.0
        %v1602 = vsel %vm1569, %v1590, 0.0
        %v1603 = vsel %vm1570, %v1590, 0.0
        %v1604 = vsel %vm1571, %v1590, 0.0
        %v1605 = vsel %vm1572, %v1590, 0.0
        %v1606 = vsel %vm1573, %v1590, 0.0
        %v1607 = vsel %vm1574, %v1590, 0.0
        %v1608 = vsel %vm1575, %v1590, 0.0
        %v1609 = vsel %vm1576, %v1590, 0.0
        %v1610 = vsel %vm1577, %v1590, 0.0
        %v1611 = vsel %vm1578, %v1590, 0.0
        %v1612 = vsel %vm1579, %v1590, 0.0
        %v1613 = vsel %vm1580, %v1590, 0.0
        %v1614 = vsel %vm1581, %v1590, 0.0
        %v1615 = vsel %vm1582, %v1590, 0.0
        %v1616 = vsel %vm1583, %v1590, 0.0
        %v1617 = vsel %vm1584, %v1590, 0.0
        %v1618 = vsel %vm1585, %v1590, 0.0
        %v1619 = vsel %vm1586, %v1590, 0.0
        %v1620 = vsel %vm1587, %v1590, 0.0
        %v1621 = vsel %vm1588, %v1590, 0.0
        %v1622 = vsel %vm1589, %v1590, 0.0
        %v1623 = vperm.slane %v1420, 0
        %v1624 = vsel %vm1526, %v1623, %v1591
        %v1625 = vsel %vm1527, %v1623, %v1592
        %v1626 = vsel %vm1528, %v1623, %v1593
        %v1627 = vsel %vm1529, %v1623, %v1594
        %v1628 = vsel %vm1530, %v1623, %v1595
        %v1629 = vsel %vm1531, %v1623, %v1596
        %v1630 = vsel %vm1532, %v1623, %v1597
        %v1631 = vsel %vm1533, %v1623, %v1598
        %v1632 = vsel %vm1534, %v1623, %v1599
        %v1633 = vsel %vm1535, %v1623, %v1600
        %v1634 = vsel %vm1536, %v1623, %v1601
        %v1635 = vsel %vm1537, %v1623, %v1602
        %v1636 = vsel %vm1538, %v1623, %v1603
        %v1637 = vsel %vm1539, %v1623, %v1604
        %v1638 = vsel %vm1540, %v1623, %v1605
        %v1639 = vsel %vm1541, %v1623, %v1606
        %v1640 = vsel %vm1542, %v1623, %v1607
        %v1641 = vsel %vm1543, %v1623, %v1608
        %v1642 = vsel %vm1544, %v1623, %v1609
        %v1643 = vsel %vm1545, %v1623, %v1610
        %v1644 = vsel %vm1546, %v1623, %v1611
        %v1645 = vsel %vm1547, %v1623, %v1612
        %v1646 = vsel %vm1548, %v1623, %v1613
        %v1647 = vsel %vm1549, %v1623, %v1614
        %v1648 = vsel %vm1550, %v1623, %v1615
        %v1649 = vsel %vm1551, %v1623, %v1616
        %v1650 = vsel %vm1552, %v1623, %v1617
        %v1651 = vsel %vm1553, %v1623, %v1618
        %v1652 = vsel %vm1554, %v1623, %v1619
        %v1653 = vsel %vm1555, %v1623, %v1620
        %v1654 = vsel %vm1556, %v1623, %v1621
        %v1655 = vsel %vm1557, %v1623, %v1622
        %v1656 = vperm.slane %v1423, 0
        %v1657 = vsel %vm1494, %v1656, %v1624
        %v1658 = vsel %vm1495, %v1656, %v1625
        %v1659 = vsel %vm1496, %v1656, %v1626
        %v1660 = vsel %vm1497, %v1656, %v1627
        %v1661 = vsel %vm1498, %v1656, %v1628
        %v1662 = vsel %vm1499, %v1656, %v1629
        %v1663 = vsel %vm1500, %v1656, %v1630
        %v1664 = vsel %vm1501, %v1656, %v1631
        %v1665 = vsel %vm1502, %v1656, %v1632
        %v1666 = vsel %vm1503, %v1656, %v1633
        %v1667 = vsel %vm1504, %v1656, %v1634
        %v1668 = vsel %vm1505, %v1656, %v1635
        %v1669 = vsel %vm1506, %v1656, %v1636
        %v1670 = vsel %vm1507, %v1656, %v1637
        %v1671 = vsel %vm1508, %v1656, %v1638
        %v1672 = vsel %vm1509, %v1656, %v1639
        %v1673 = vsel %vm1510, %v1656, %v1640
        %v1674 = vsel %vm1511, %v1656, %v1641
        %v1675 = vsel %vm1512, %v1656, %v1642
        %v1676 = vsel %vm1513, %v1656, %v1643
        %v1677 = vsel %vm1514, %v1656, %v1644
        %v1678 = vsel %vm1515, %v1656, %v1645
        %v1679 = vsel %vm1516, %v1656, %v1646
        %v1680 = vsel %vm1517, %v1656, %v1647
        %v1681 = vsel %vm1518, %v1656, %v1648
        %v1682 = vsel %vm1519, %v1656, %v1649
        %v1683 = vsel %vm1520, %v1656, %v1650
        %v1684 = vsel %vm1521, %v1656, %v1651
        %v1685 = vsel %vm1522, %v1656, %v1652
        %v1686 = vsel %vm1523, %v1656, %v1653
        %v1687 = vsel %vm1524, %v1656, %v1654
        %v1688 = vsel %vm1525, %v1656, %v1655
        %v1689 = vperm.slane %v1417, 0
        %v1690 = vsel %vm1462, %v1689, %v1657
        %v1691 = vsel %vm1463, %v1689, %v1658
        %v1692 = vsel %vm1464, %v1689, %v1659
        %v1693 = vsel %vm1465, %v1689, %v1660
        %v1694 = vsel %vm1466, %v1689, %v1661
        %v1695 = vsel %vm1467, %v1689, %v1662
        %v1696 = vsel %vm1468, %v1689, %v1663
        %v1697 = vsel %vm1469, %v1689, %v1664
        %v1698 = vsel %vm1470, %v1689, %v1665
        %v1699 = vsel %vm1471, %v1689, %v1666
        %v1700 = vsel %vm1472, %v1689, %v1667
        %v1701 = vsel %vm1473, %v1689, %v1668
        %v1702 = vsel %vm1474, %v1689, %v1669
        %v1703 = vsel %vm1475, %v1689, %v1670
        %v1704 = vsel %vm1476, %v1689, %v1671
        %v1705 = vsel %vm1477, %v1689, %v1672
        %v1706 = vsel %vm1478, %v1689, %v1673
        %v1707 = vsel %vm1479, %v1689, %v1674
        %v1708 = vsel %vm1480, %v1689, %v1675
        %v1709 = vsel %vm1481, %v1689, %v1676
        %v1710 = vsel %vm1482, %v1689, %v1677
        %v1711 = vsel %vm1483, %v1689, %v1678
        %v1712 = vsel %vm1484, %v1689, %v1679
        %v1713 = vsel %vm1485, %v1689, %v1680
        %v1714 = vsel %vm1486, %v1689, %v1681
        %v1715 = vsel %vm1487, %v1689, %v1682
        %v1716 = vsel %vm1488, %v1689, %v1683
        %v1717 = vsel %vm1489, %v1689, %v1684
        %v1718 = vsel %vm1490, %v1689, %v1685
        %v1719 = vsel %vm1491, %v1689, %v1686
        %v1720 = vsel %vm1492, %v1689, %v1687
        %v1721 = vsel %vm1493, %v1689, %v1688
        %1722 = vst [vmem:[#allocation1] ss:$4 sm:$0xff] %v964
        %v1723 = vld.sshfl [vmem:[#allocation1] sm:$0xff pattern:$0x73625140]
        %v1724 = vld.sshfl [vmem:[#allocation1 + $0x8] sm:$0xff pattern:$0x73625140]
        %1727 = vmatpush.msra.mxu0 %v1705
        %1728 = vmatpush.msra.mxu0 %v1704
        %1729 = vmatpush.msra.mxu0 %v1703
        %1730 = vmatpush.msra.mxu0 %v1702
        %1731 = vmatpush.msra.mxu0 %v1701
        %1732 = vmatpush.msra.mxu0 %v1700
        %1733 = vmatpush.msra.mxu0 %v1699
        %1734 = vmatpush.msra.mxu0 %v1698
        %1735 = vmatpush.msra.mxu0 %v1697
        %1736 = vmatpush.msra.mxu0 %v1696
        %1737 = vmatpush.msra.mxu0 %v1695
        %1738 = vmatpush.msra.mxu0 %v1694
        %1739 = vmatpush.msra.mxu0 %v1693
        %1740 = vmatpush.msra.mxu0 %v1692
        %1741 = vmatpush.msra.mxu0 %v1691
        %1742 = vmatpush.msra.mxu0 %v1690
        %1743 = vmatmul.f32.gmra.mxu0 %v1723
        %v1744 = vpop.f32.mrf.mxu0
        %v1745 = vadd.f32 0.0, %v1744
        %1746 = vdwg.mxu0
        %1747 = vmatpush.msra.mxu0 %v1721
        %1748 = vmatpush.msra.mxu0 %v1720
        %1749 = vmatpush.msra.mxu0 %v1719
        %1750 = vmatpush.msra.mxu0 %v1718
        %1751 = vmatpush.msra.mxu0 %v1717
        %1752 = vmatpush.msra.mxu0 %v1716
        %1753 = vmatpush.msra.mxu0 %v1715
        %1754 = vmatpush.msra.mxu0 %v1714
        %1755 = vmatpush.msra.mxu0 %v1713
        %1756 = vmatpush.msra.mxu0 %v1712
        %1757 = vmatpush.msra.mxu0 %v1711
        %1758 = vmatpush.msra.mxu0 %v1710
        %1759 = vmatpush.msra.mxu0 %v1709
        %1760 = vmatpush.msra.mxu0 %v1708
        %1761 = vmatpush.msra.mxu0 %v1707
        %1762 = vmatpush.msra.mxu0 %v1706
        %1763 = vmatmul.f32.gmra.mxu0 %v1724
        %v1764 = vpop.f32.mrf.mxu0
        %v1765 = vadd.f32 %v1745, %v1764
        %1766 = vdwg.mxu0
        %v1767 = vrot.slane %v964, 2
        %v1769 = vadd.f32 %v1767, %v1765
        %1770 = vst [vmem:[#allocation2 + $0x2] sm:$0x3] %v1769
        %1771 = vst [vmem:[%s128 + $0x2] sm:$0x3] %v1769
      $region36: #{dvf2ddf.1} parent=23 // pred_fallthru
        _
      %p1772 = scmp.lt.s32.totalorder %s16, 1
      %s1773 = scalar_select %p1772, %s16, 1
      %s1774 = smul.addr %s1773, 2
      %s1775 = smul.addr %s1774, 2
      %s1776 = scalar_lea.vmem %s1, %s1775
      // Predicated region
      $region37: #{dvf2ddf.1} parent=23 // pred_check
        %p1777 = pneg %p68
      $region38: #{dvf2ddf.1} parent=23 // pred_check_branch
        %1779 = sbr.rel (%p1777) target = $region40
      $region39: #{dvf2ddf.1} parent=23 // pred_region
        _
      $region40: #{dvf2ddf.1} parent=23 // pred_fallthru
        _
    $region24: #{dvf2ddf.1} parent=5 // pred_fallthru
      _
    %p1780 = scmp.le.s32.totalorder 2, %s7
    // Predicated region
    $region41: #{dvf2ddf.1} parent=5 // pred_check
      %p1781 = pneg %p1780
    $region42: #{dvf2ddf.1} parent=5 // pred_check_branch
      %1783 = sbr.rel (%p1781) target = $region44
    $region43: #{dvf2ddf.1} parent=5 // pred_region
      %s1784 = ssub.s32 %s7, 2
      // Predicated region
      $region45: #{dvf2ddf.1} parent=43 // pred_check
        %p1785 = pneg %p74
      $region46: #{dvf2ddf.1} parent=43 // pred_check_branch
        %1787 = sbr.rel (%p1785) target = $region48
      $region47: #{dvf2ddf.1} parent=43 // pred_region
        %p1788 = scmp.lt.s32.totalorder %s18, 1
        %s1789 = scalar_select %p1788, %s18, 1
        %s1790 = smul.addr %s1789, 2
        %s1791 = smul.addr %s1790, 2
        %s1792 = scalar_lea.vmem %s1, %s1791
      $region48: #{dvf2ddf.1} parent=43 // pred_fallthru
        _
    $region44: #{dvf2ddf.1} parent=5 // pred_fallthru
      _
  $region6: #{dvf2ddf.1} parent=0 // loop_footer
    %s11 = sadd.s32 1, %s7
  $region7: #{dvf2ddf.1} parent=0 // loop_footer_branch
    %6 = sbr.rel target = $region3
  $region8: #{dvf2ddf.1} parent=0 // loop_exit
    _

</llo_original>
